<compile_context>
chip_gen: v7x
topology: tpu7x:2x2x1
jax: 0.10.0
libtpu: 0.0.40
codegen_flags: <defaults>
</compile_context>

<pallas_src>
import functools

import jax
import jax.numpy as jnp
from jax.experimental import pallas as pl
from jax.experimental.pallas import tpu as pltpu

# --- config (mirrors SingleEndedEZConv with small synthetic sizes) ---
N_SAMPLES = 16
C_IN = N_SAMPLES * 2      # 'conv' algorithm -> in_planes = n_samples * 2
C_OUT = 2                 # SparseConv2DForEZ default out_planes (E, Z)
H, W = 14, 11             # self.spatial_size = array([14, 11])
KH = KW = 3               # 3x3 conv, padding=1

HP, WP = H + 2, W + 2     # zero-padded spatial block per batch (16, 13)
K_TOT = KH * KW * C_IN    # 288: flattened contraction dim (tap*C_IN + c)
MAX_TAP_OFF = (KH - 1) * WP + (KW - 1)   # 28


def _round_up(x, m):
    return (x + m - 1) // m * m


def _make_kernel(n_pad: int, m_out: int, l_pad: int):
    def conv_kernel(coords_ref, featsT_ref, w_ref, b_ref, o_ref, x_ref, pT_ref):
        # coords_ref : (n_pad, 3)      int32  [x, y, batch] (zero rows for padding)
        # featsT_ref : (C_IN, n_pad)   f32    features, event axis on lanes
        # w_ref      : (C_OUT, K_TOT)  f32    lane-dense flattened conv weights
        # b_ref      : (C_OUT, 1)      f32    bias
        # o_ref      : (C_OUT, m_out)  f32    lane-dense output
        # x_ref      : (C_IN, l_pad)   f32    scratch: dense stacked padded grid
        # pT_ref     : (K_TOT, m_out)  f32    scratch: transposed im2col patches

        # ---- fused sparse->dense scatter (duplicates sum, f32) -------------
        # flat padded index of event i: l = (b*HP + x + 1)*WP + (y + 1)
        xs = coords_ref[:, 0:1]
        ys = coords_ref[:, 1:2]
        bs = coords_ref[:, 2:3]
        l_col = (bs * HP + xs + 1) * WP + (ys + 1)                    # (n_pad, 1)
        lane = jax.lax.broadcasted_iota(jnp.int32, (n_pad, l_pad), 1)
        onehot = (lane == l_col).astype(jnp.float32)                  # (n_pad, l_pad)
        # zero-padded events have zero features -> no contribution
        x_ref[...] = jnp.dot(featsT_ref[...], onehot,
                             preferred_element_type=jnp.float32)      # (C_IN, l_pad)

        # ---- im2col: 9 static-offset tap copies (batch-independent) --------
        for kh in range(KH):
            for kw in range(KW):
                tap = kh * KW + kw
                off = kh * WP + kw                                    # static, <= 28
                pT_ref[tap * C_IN:(tap + 1) * C_IN, :] = x_ref[:, off:off + m_out]

        # ---- single K=288 matmul + f32 bias epilogue ------------------------
        acc = jnp.dot(w_ref[...], pT_ref[...],
                      preferred_element_type=jnp.float32)             # (C_OUT, m_out)
        o_ref[...] = acc + b_ref[...]

    return conv_kernel


def prepare_params(weights, bias):
    """One-time parameter prep (hoisted out of the per-call forward).

    weights: (KH*KW, C_IN, C_OUT) f32, bias: (1, C_OUT) f32.
    Returns lane-dense flattened weights (C_OUT, K_TOT) and bias column (C_OUT, 1).
    """
    w_flat = jnp.asarray(weights, jnp.float32).reshape(KH * KW * C_IN, C_OUT).T
    b_col = jnp.asarray(bias, jnp.float32).reshape(C_OUT, 1)
    return w_flat, b_col


@functools.partial(jax.jit, static_argnames=("batch_size",))
def single_ended_ez_conv_forward(coords, feats, w_flat, b_col, *, batch_size):
    """coords: (N, 3) int32 [x, y, batch]; feats: (N, C_IN) f32.

    w_flat: (C_OUT, K_TOT) f32, b_col: (C_OUT, 1) f32 (from prepare_params).
    Returns (batch_size, C_OUT, H, W) f32 (NCHW, matching PyTorch/spconv).
    """
    B = int(batch_size)
    N = coords.shape[0]

    # Stacked-batch layout: all batches stacked along the padded H axis.
    L_STACK = B * HP * WP                      # valid flattened length
    M_OUT = _round_up(L_STACK, 128)            # lane-dense output width
    L_PAD = M_OUT + 128                        # >= M_OUT + MAX_TAP_OFF, 128-multiple
    N_PAD = _round_up(max(N, 8), 8)            # pad events to sublane multiple

    pad = N_PAD - N
    coords_p = jnp.pad(coords.astype(jnp.int32), ((0, pad), (0, 0)))
    featsT = jnp.pad(feats.astype(jnp.float32), ((0, pad), (0, 0))).T   # (C_IN, N_PAD)

    out_flat = pl.pallas_call(
        _make_kernel(N_PAD, M_OUT, L_PAD),
        out_shape=jax.ShapeDtypeStruct((C_OUT, M_OUT), jnp.float32),
        grid=(1,),
        in_specs=[
            pl.BlockSpec((N_PAD, 3), lambda i: (0, 0)),
            pl.BlockSpec((C_IN, N_PAD), lambda i: (0, 0)),
            pl.BlockSpec((C_OUT, K_TOT), lambda i: (0, 0)),
            pl.BlockSpec((C_OUT, 1), lambda i: (0, 0)),
        ],
        out_specs=pl.BlockSpec((C_OUT, M_OUT), lambda i: (0, 0)),
        scratch_shapes=[
            pltpu.VMEM((C_IN, L_PAD), jnp.float32),    # dense stacked grid
            pltpu.VMEM((K_TOT, M_OUT), jnp.float32),   # transposed im2col
        ],
        compiler_params=pltpu.CompilerParams(
            dimension_semantics=("arbitrary",)),
    )(coords_p, featsT, w_flat, b_col)

    # crop: (C_OUT, B*HP*WP) -> (C_OUT, B, HP, WP) -> drop pad rows/cols -> NCHW
    out = out_flat[:, :L_STACK].reshape(C_OUT, B, HP, WP)[:, :, :H, :W]
    return out.transpose(1, 0, 2, 3)


def _reference(coords, feats, weights, bias, batch_size):
    """Pure-JAX f32 reference (same math, via lax conv) for a sanity check."""
    dense = jnp.zeros((batch_size, H, W, C_IN), jnp.float32)
    dense = dense.at[coords[:, 2], coords[:, 0], coords[:, 1]].add(feats)
    w_hwio = weights.reshape(KH, KW, C_IN, C_OUT)
    out = jax.lax.conv_general_dilated(
        dense, w_hwio, window_strides=(1, 1), padding="SAME",
        dimension_numbers=("NHWC", "HWIO", "NHWC"))
    out = out + bias.reshape(1, 1, 1, C_OUT)
    return out.transpose(0, 3, 1, 2)


if __name__ == "__main__":
    key = jax.random.PRNGKey(0)
    kf, kw_, kb = jax.random.split(key, 3)

    # Sparse event: (N, 3) coords [x, y, batch], sorted by batch so that
    # coords[-1, -1] + 1 gives batch_size = 2 (as in the PyTorch forward).
    coords = jnp.array(
        [[0, 0, 0], [3, 2, 0], [7, 5, 0], [13, 10, 0], [6, 6, 0],
         [1, 1, 1], [4, 9, 1], [9, 3, 1], [12, 8, 1], [10, 10, 1]],
        dtype=jnp.int32)
    feats = jax.random.normal(kf, (coords.shape[0], C_IN), jnp.float32)

    # Deterministic synthetic parameters (no checkpoint load).
    weights = 0.1 * jax.random.normal(kw_, (KH * KW, C_IN, C_OUT), jnp.float32)
    bias = 0.01 * jax.random.normal(kb, (1, C_OUT), jnp.float32)

    # batch_size = x[0][-1, -1] + 1, computed once host-side (outside traced path)
    batch_size = int(coords[-1, -1]) + 1

    # one-time parameter preparation (hoisted out of the per-call forward)
    w_flat, b_col = prepare_params(weights, bias)

    out = single_ended_ez_conv_forward(coords, feats, w_flat, b_col,
                                       batch_size=batch_size)
    out = jax.block_until_ready(out)

    ref = _reference(coords, feats, weights, bias, batch_size)
    assert out.shape == (batch_size, C_OUT, H, W), out.shape
    max_err = float(jnp.max(jnp.abs(out - ref)))
    assert jnp.allclose(out, ref, atol=2e-3, rtol=2e-3), max_err  # f32 everywhere

    print("KERNEL_OK")
</pallas_src>

<mosaic_0001>
module attributes {stable_mosaic.version = 11 : i64} {
  func.func @conv_kernel(%arg0: i32, %arg1: memref<16x3xi32, #tpu.memory_space<vmem>>, %arg2: memref<32x16xf32, #tpu.memory_space<vmem>>, %arg3: memref<2x288xf32, #tpu.memory_space<vmem>>, %arg4: memref<2x1xf32, #tpu.memory_space<vmem>>, %arg5: memref<2x512xf32, #tpu.memory_space<vmem>>, %arg6: memref<32x640xf32, #tpu.memory_space<vmem>>, %arg7: memref<288x512xf32, #tpu.memory_space<vmem>>) attributes {dimension_semantics = [#tpu.dimension_semantics<arbitrary>], iteration_bounds = array<i64: 1>, scalar_prefetch = 0 : i64, scratch_operands = 2 : i64, tpu.core_type = #tpu.core_type<tc>, window_params = [{pipeline_mode = #tpu.pipeline_mode<synchronous>, transform_indices = @transform_0, window_bounds = array<i64: 16, 3>}, {pipeline_mode = #tpu.pipeline_mode<synchronous>, transform_indices = @transform_1, window_bounds = array<i64: 32, 16>}, {pipeline_mode = #tpu.pipeline_mode<synchronous>, transform_indices = @transform_2, window_bounds = array<i64: 2, 288>}, {pipeline_mode = #tpu.pipeline_mode<synchronous>, transform_indices = @transform_3, window_bounds = array<i64: 2, 1>}, {pipeline_mode = #tpu.pipeline_mode<synchronous>, transform_indices = @transform_4, window_bounds = array<i64: 2, 512>}]} {
    %c0 = arith.constant 0 : index
    %c0_0 = arith.constant 0 : index
    %0 = vector.load %arg1[%c0, %c0_0] : memref<16x3xi32, #tpu.memory_space<vmem>>, vector<16x1xi32>
    %c0_1 = arith.constant 0 : index
    %c1 = arith.constant 1 : index
    %1 = vector.load %arg1[%c0_1, %c1] : memref<16x3xi32, #tpu.memory_space<vmem>>, vector<16x1xi32>
    %c0_2 = arith.constant 0 : index
    %c2 = arith.constant 2 : index
    %2 = vector.load %arg1[%c0_2, %c2] : memref<16x3xi32, #tpu.memory_space<vmem>>, vector<16x1xi32>
    %c16_i32 = arith.constant 16 : i32
    %3 = vector.broadcast %c16_i32 : i32 to vector<16x1xi32>
    %4 = arith.muli %2, %3 : vector<16x1xi32>
    %5 = arith.addi %4, %0 : vector<16x1xi32>
    %c1_i32 = arith.constant 1 : i32
    %6 = vector.broadcast %c1_i32 : i32 to vector<16x1xi32>
    %7 = arith.addi %5, %6 : vector<16x1xi32>
    %c13_i32 = arith.constant 13 : i32
    %8 = vector.broadcast %c13_i32 : i32 to vector<16x1xi32>
    %9 = arith.muli %7, %8 : vector<16x1xi32>
    %c1_i32_3 = arith.constant 1 : i32
    %10 = vector.broadcast %c1_i32_3 : i32 to vector<16x1xi32>
    %11 = arith.addi %1, %10 : vector<16x1xi32>
    %12 = arith.addi %9, %11 : vector<16x1xi32>
    %13 = tpu.iota {dimensions = array<i32: 1>} : vector<16x640xi32>
    %14 = vector.broadcast %12 : vector<16x1xi32> to vector<16x640xi32>
    %15 = arith.cmpi eq, %13, %14 : vector<16x640xi32>
    %16 = arith.extui %15 : vector<16x640xi1> to vector<16x640xi32>
    %17 = arith.sitofp %16 : vector<16x640xi32> to vector<16x640xf32>
    %c0_4 = arith.constant 0 : index
    %c0_5 = arith.constant 0 : index
    %18 = vector.load %arg2[%c0_4, %c0_5] : memref<32x16xf32, #tpu.memory_space<vmem>>, vector<32x16xf32>
    %cst = arith.constant dense<0.000000e+00> : vector<32x640xf32>
    %19 = tpu.matmul %18, %17, %cst {dimension_numbers = #tpu.dot_dimension_numbers<[1], [0], [0], [1], [0, 0, 1, 1], [], []>} : vector<32x16xf32>, vector<16x640xf32>, vector<32x640xf32> -> vector<32x640xf32>
    %c0_6 = arith.constant 0 : index
    %c0_7 = arith.constant 0 : index
    %20 = vector.load %arg6[%c0_6, %c0_7] : memref<32x640xf32, #tpu.memory_space<vmem>>, vector<32x640xf32>
    tpu.vector_store %arg6[%c0_6, %c0_7], %19 {strides = array<i32>} : memref<32x640xf32, #tpu.memory_space<vmem>>, vector<32x640xf32>,
    %c0_8 = arith.constant 0 : index
    %c0_9 = arith.constant 0 : index
    %21 = vector.load %arg6[%c0_8, %c0_9] : memref<32x640xf32, #tpu.memory_space<vmem>>, vector<32x512xf32>
    %c0_10 = arith.constant 0 : index
    %c0_11 = arith.constant 0 : index
    %22 = vector.load %arg7[%c0_10, %c0_11] : memref<288x512xf32, #tpu.memory_space<vmem>>, vector<32x512xf32>
    tpu.vector_store %arg7[%c0_10, %c0_11], %21 {strides = array<i32>} : memref<288x512xf32, #tpu.memory_space<vmem>>, vector<32x512xf32>,
    %c0_12 = arith.constant 0 : index
    %c1_13 = arith.constant 1 : index
    %23 = vector.load %arg6[%c0_12, %c1_13] : memref<32x640xf32, #tpu.memory_space<vmem>>, vector<32x512xf32>
    %c32 = arith.constant 32 : index
    %c0_14 = arith.constant 0 : index
    %24 = vector.load %arg7[%c32, %c0_14] : memref<288x512xf32, #tpu.memory_space<vmem>>, vector<32x512xf32>
    tpu.vector_store %arg7[%c32, %c0_14], %23 {strides = array<i32>} : memref<288x512xf32, #tpu.memory_space<vmem>>, vector<32x512xf32>,
    %c0_15 = arith.constant 0 : index
    %c2_16 = arith.constant 2 : index
    %25 = vector.load %arg6[%c0_15, %c2_16] : memref<32x640xf32, #tpu.memory_space<vmem>>, vector<32x512xf32>
    %c64 = arith.constant 64 : index
    %c0_17 = arith.constant 0 : index
    %26 = vector.load %arg7[%c64, %c0_17] : memref<288x512xf32, #tpu.memory_space<vmem>>, vector<32x512xf32>
    tpu.vector_store %arg7[%c64, %c0_17], %25 {strides = array<i32>} : memref<288x512xf32, #tpu.memory_space<vmem>>, vector<32x512xf32>,
    %c0_18 = arith.constant 0 : index
    %c13 = arith.constant 13 : index
    %27 = vector.load %arg6[%c0_18, %c13] : memref<32x640xf32, #tpu.memory_space<vmem>>, vector<32x512xf32>
    %c96 = arith.constant 96 : index
    %c0_19 = arith.constant 0 : index
    %28 = vector.load %arg7[%c96, %c0_19] : memref<288x512xf32, #tpu.memory_space<vmem>>, vector<32x512xf32>
    tpu.vector_store %arg7[%c96, %c0_19], %27 {strides = array<i32>} : memref<288x512xf32, #tpu.memory_space<vmem>>, vector<32x512xf32>,
    %c0_20 = arith.constant 0 : index
    %c14 = arith.constant 14 : index
    %29 = vector.load %arg6[%c0_20, %c14] : memref<32x640xf32, #tpu.memory_space<vmem>>, vector<32x512xf32>
    %c128 = arith.constant 128 : index
    %c0_21 = arith.constant 0 : index
    %30 = vector.load %arg7[%c128, %c0_21] : memref<288x512xf32, #tpu.memory_space<vmem>>, vector<32x512xf32>
    tpu.vector_store %arg7[%c128, %c0_21], %29 {strides = array<i32>} : memref<288x512xf32, #tpu.memory_space<vmem>>, vector<32x512xf32>,
    %c0_22 = arith.constant 0 : index
    %c15 = arith.constant 15 : index
    %31 = vector.load %arg6[%c0_22, %c15] : memref<32x640xf32, #tpu.memory_space<vmem>>, vector<32x512xf32>
    %c160 = arith.constant 160 : index
    %c0_23 = arith.constant 0 : index
    %32 = vector.load %arg7[%c160, %c0_23] : memref<288x512xf32, #tpu.memory_space<vmem>>, vector<32x512xf32>
    tpu.vector_store %arg7[%c160, %c0_23], %31 {strides = array<i32>} : memref<288x512xf32, #tpu.memory_space<vmem>>, vector<32x512xf32>,
    %c0_24 = arith.constant 0 : index
    %c26 = arith.constant 26 : index
    %33 = vector.load %arg6[%c0_24, %c26] : memref<32x640xf32, #tpu.memory_space<vmem>>, vector<32x512xf32>
    %c192 = arith.constant 192 : index
    %c0_25 = arith.constant 0 : index
    %34 = vector.load %arg7[%c192, %c0_25] : memref<288x512xf32, #tpu.memory_space<vmem>>, vector<32x512xf32>
    tpu.vector_store %arg7[%c192, %c0_25], %33 {strides = array<i32>} : memref<288x512xf32, #tpu.memory_space<vmem>>, vector<32x512xf32>,
    %c0_26 = arith.constant 0 : index
    %c27 = arith.constant 27 : index
    %35 = vector.load %arg6[%c0_26, %c27] : memref<32x640xf32, #tpu.memory_space<vmem>>, vector<32x512xf32>
    %c224 = arith.constant 224 : index
    %c0_27 = arith.constant 0 : index
    %36 = vector.load %arg7[%c224, %c0_27] : memref<288x512xf32, #tpu.memory_space<vmem>>, vector<32x512xf32>
    tpu.vector_store %arg7[%c224, %c0_27], %35 {strides = array<i32>} : memref<288x512xf32, #tpu.memory_space<vmem>>, vector<32x512xf32>,
    %c0_28 = arith.constant 0 : index
    %c28 = arith.constant 28 : index
    %37 = vector.load %arg6[%c0_28, %c28] : memref<32x640xf32, #tpu.memory_space<vmem>>, vector<32x512xf32>
    %c256 = arith.constant 256 : index
    %c0_29 = arith.constant 0 : index
    %38 = vector.load %arg7[%c256, %c0_29] : memref<288x512xf32, #tpu.memory_space<vmem>>, vector<32x512xf32>
    tpu.vector_store %arg7[%c256, %c0_29], %37 {strides = array<i32>} : memref<288x512xf32, #tpu.memory_space<vmem>>, vector<32x512xf32>,
    %c0_30 = arith.constant 0 : index
    %c0_31 = arith.constant 0 : index
    %39 = vector.load %arg3[%c0_30, %c0_31] : memref<2x288xf32, #tpu.memory_space<vmem>>, vector<2x288xf32>
    %c0_32 = arith.constant 0 : index
    %c0_33 = arith.constant 0 : index
    %40 = vector.load %arg7[%c0_32, %c0_33] : memref<288x512xf32, #tpu.memory_space<vmem>>, vector<288x512xf32>
    %cst_34 = arith.constant dense<0.000000e+00> : vector<2x512xf32>
    %41 = tpu.matmul %39, %40, %cst_34 {dimension_numbers = #tpu.dot_dimension_numbers<[1], [0], [0], [1], [0, 0, 1, 1], [], []>} : vector<2x288xf32>, vector<288x512xf32>, vector<2x512xf32> -> vector<2x512xf32>
    %c0_35 = arith.constant 0 : index
    %c0_36 = arith.constant 0 : index
    %42 = vector.load %arg4[%c0_35, %c0_36] : memref<2x1xf32, #tpu.memory_space<vmem>>, vector<2x1xf32>
    %43 = vector.broadcast %42 : vector<2x1xf32> to vector<2x512xf32>
    %44 = arith.addf %41, %43 : vector<2x512xf32>
    %c0_37 = arith.constant 0 : index
    %c0_38 = arith.constant 0 : index
    %45 = vector.load %arg5[%c0_37, %c0_38] : memref<2x512xf32, #tpu.memory_space<vmem>>, vector<2x512xf32>
    tpu.vector_store %arg5[%c0_37, %c0_38], %44 {strides = array<i32>} : memref<2x512xf32, #tpu.memory_space<vmem>>, vector<2x512xf32>,
    return
  }
  func.func @transform_0(%arg0: i32) -> (i32, i32) {
    %c0_i32 = arith.constant 0 : i32
    %c0_i32_0 = arith.constant 0 : i32
    %c0_i32_1 = arith.constant 0 : i32
    return %c0_i32, %c0_i32_0 : i32, i32
  }
  func.func @transform_1(%arg0: i32) -> (i32, i32) {
    %c0_i32 = arith.constant 0 : i32
    %c0_i32_0 = arith.constant 0 : i32
    %c0_i32_1 = arith.constant 0 : i32
    return %c0_i32, %c0_i32_0 : i32, i32
  }
  func.func @transform_2(%arg0: i32) -> (i32, i32) {
    %c0_i32 = arith.constant 0 : i32
    %c0_i32_0 = arith.constant 0 : i32
    %c0_i32_1 = arith.constant 0 : i32
    return %c0_i32, %c0_i32_0 : i32, i32
  }
  func.func @transform_3(%arg0: i32) -> (i32, i32) {
    %c0_i32 = arith.constant 0 : i32
    %c0_i32_0 = arith.constant 0 : i32
    %c0_i32_1 = arith.constant 0 : i32
    return %c0_i32, %c0_i32_0 : i32, i32
  }
  func.func @transform_4(%arg0: i32) -> (i32, i32) {
    %c0_i32 = arith.constant 0 : i32
    %c0_i32_0 = arith.constant 0 : i32
    %c0_i32_1 = arith.constant 0 : i32
    return %c0_i32, %c0_i32_0 : i32, i32
  }
}

</mosaic_0001>

<llo_original>
// kernel: single_ended_ez_conv_forward.1
$region0: #{single_ended_ez_conv_forward.1}
  #allocation0 [shape = 'u32[]', space=smem, size = 0x4, offset = 0x4, fixed_abs, tag = 'smem constant byte address 0x4 - core index']
  #allocation1 [shape = 'u32[144,128]{1,0:T(1,128)}', space=vmem, size = 0x12000, scoped, tag = 'internal scratch']
  #allocation2 [shape = 'f32[32,640]{1,0:T(8,128)}', space=vmem, size = 0x14000, scoped, tag = 'scratch operand']
  #allocation3 [shape = 'f32[288,512]{1,0:T(8,128)}', space=vmem, size = 0x90000, scoped, tag = 'scratch operand']
  %s0 = inlined_call_operand.vmem [shape: s32[16,3], index: 0, kind: input, shape index: {}]
  %s1 = inlined_call_operand.vmem [shape: f32[32,16], index: 1, kind: input, shape index: {}]
  %s2 = inlined_call_operand.vmem [shape: f32[2,288], index: 2, kind: input, shape index: {}]
  %s3 = inlined_call_operand.vmem [shape: f32[2,1], index: 3, kind: input, shape index: {}]
  %s4 = inlined_call_operand.vmem [shape: f32[2,512], index: 4, kind: output, shape index: {}]
  %s5 = sld [smem:[#allocation0]]
  $region26: #{single_ended_ez_conv_forward.1} parent=0
    _
  %s7 = ssub.s32 1, %s5
  %s8 = scalar_select 0, %s7, %s5
  // Predicated region
  $region2: #{single_ended_ez_conv_forward.1} parent=0 // pred_check
    _
  $region3: #{single_ended_ez_conv_forward.1} parent=0 // pred_check_branch
    %10 = sbr.rel (0) target = $region5
  $region4: #{single_ended_ez_conv_forward.1} parent=0 // pred_region
    _
  $region5: #{single_ended_ez_conv_forward.1} parent=0 // pred_fallthru
    _
  // Predicated region
  $region6: #{single_ended_ez_conv_forward.1} parent=0 // pred_check
    _
  $region7: #{single_ended_ez_conv_forward.1} parent=0 // pred_check_branch
    %12 = sbr.rel (0) target = $region9
  $region8: #{single_ended_ez_conv_forward.1} parent=0 // pred_region
    _
  $region9: #{single_ended_ez_conv_forward.1} parent=0 // pred_fallthru
    _
  // Predicated region
  $region10: #{single_ended_ez_conv_forward.1} parent=0 // pred_check
    _
  $region11: #{single_ended_ez_conv_forward.1} parent=0 // pred_check_branch
    %14 = sbr.rel (0) target = $region13
  $region12: #{single_ended_ez_conv_forward.1} parent=0 // pred_region
    _
  $region13: #{single_ended_ez_conv_forward.1} parent=0 // pred_fallthru
    _
  // Predicated region
  $region14: #{single_ended_ez_conv_forward.1} parent=0 // pred_check
    _
  $region15: #{single_ended_ez_conv_forward.1} parent=0 // pred_check_branch
    %16 = sbr.rel (0) target = $region17
  $region16: #{single_ended_ez_conv_forward.1} parent=0 // pred_region
    _
  $region17: #{single_ended_ez_conv_forward.1} parent=0 // pred_fallthru
    _
  %v17 = vld [vmem:[%s0] sm:$0xff]
  %v18 = vld [vmem:[%s0 + $0x8] sm:$0xff]
  %v19 = vmul.u32 %v17, 16
  %v20 = vmul.u32 %v18, 16
  %21 = vrot.lane.b32.xlu0 %v17, 2
  %v22 = vpop.permute.xlu0 %21
  %23 = vrot.lane.b32.xlu0 %v18, 2
  %v24 = vpop.permute.xlu0 %23
  %v25 = vadd.s32 %v19, %v22
  %v26 = vadd.s32 %v20, %v24
  %v27 = vadd.s32 %v25, 1
  %v28 = vadd.s32 %v26, 1
  %v29 = vmul.u32 %v27, 13
  %v30 = vmul.u32 %v28, 13
  %v31 = vadd.s32 %v17, 1
  %v32 = vadd.s32 %v18, 1
  %33 = vrot.lane.b32.xlu0 %v31, 1
  %v34 = vpop.permute.xlu0 %33
  %35 = vrot.lane.b32.xlu0 %v32, 1
  %v36 = vpop.permute.xlu0 %35
  %v37 = vadd.s32 %v29, %v34
  %v38 = vadd.s32 %v30, %v36
  %v39 = vlaneseq
  %v40 = vand.u32 %v39, 127
  %v41 = vadd.s32 %v40, 128
  %v42 = vadd.s32 %v40, 256
  %v43 = vadd.s32 %v40, 384
  %v44 = vadd.s32 %v40, 512
  %45 = vset.pattern.permute.xlu0 2
  %46 = vperm.xlu0 %45, %v37
  %v47 = vpop.permute.xlu0 %46
  %48 = vset.pattern.permute.xlu0 2
  %49 = vperm.xlu0 %48, %v38
  %v50 = vpop.permute.xlu0 %49
  %vm51 = vcmp.eq.s32.totalorder %v40, %v47
  %vm52 = vcmp.eq.s32.totalorder %v41, %v47
  %vm53 = vcmp.eq.s32.totalorder %v42, %v47
  %vm54 = vcmp.eq.s32.totalorder %v43, %v47
  %vm55 = vcmp.eq.s32.totalorder %v44, %v47
  %vm56 = vcmp.eq.s32.totalorder %v40, %v50
  %vm57 = vcmp.eq.s32.totalorder %v41, %v50
  %vm58 = vcmp.eq.s32.totalorder %v42, %v50
  %vm59 = vcmp.eq.s32.totalorder %v43, %v50
  %vm60 = vcmp.eq.s32.totalorder %v44, %v50
  %v61 = vsel %vm51, 1, 0
  %v62 = vsel %vm52, 1, 0
  %v63 = vsel %vm53, 1, 0
  %v64 = vsel %vm54, 1, 0
  %v65 = vsel %vm55, 1, 0
  %v66 = vsel %vm56, 1, 0
  %v67 = vsel %vm57, 1, 0
  %v68 = vsel %vm58, 1, 0
  %v69 = vsel %vm59, 1, 0
  %v70 = vsel %vm60, 1, 0
  %v71 = vcvt.s32.f32 %v61
  %v72 = vcvt.s32.f32 %v62
  %v73 = vcvt.s32.f32 %v63
  %v74 = vcvt.s32.f32 %v64
  %v75 = vcvt.s32.f32 %v65
  %v76 = vcvt.s32.f32 %v66
  %v77 = vcvt.s32.f32 %v67
  %v78 = vcvt.s32.f32 %v68
  %v79 = vcvt.s32.f32 %v69
  %v80 = vcvt.s32.f32 %v70
  %v81 = vld [vmem:[%s1] sm:$0xff]
  %v82 = vld [vmem:[%s1 + $0x8] sm:$0xff]
  %v83 = vld [vmem:[%s1 + $0x10] sm:$0xff]
  %v84 = vld [vmem:[%s1 + $0x18] sm:$0xff]
  %vm85 = vcmask 130048
  %v87 = vsel %vm85, %v81, 0
  %v90 = vsel %vm85, %v82, 0
  %v93 = vsel %vm85, %v83, 0
  %v96 = vsel %vm85, %v84, 0
  %98 = vmatprep.subr.mxu0 %v72
  %99 = vmatpush1.msra.mxu0 %v71
  %100 = vmatprep.subr.mxu0 %v77
  %101 = vmatpush1.msra.mxu0 %v76
  %102 = vmatprep.subr.mxu0 0.0
  %103 = vmatpush1.msra.mxu0 0.0
  %104 = vmatprep.subr.mxu0 0.0
  %105 = vmatpush1.msra.mxu0 0.0
  %106 = vmatprep.subr.mxu0 0.0
  %107 = vmatpush1.msra.mxu0 0.0
  %108 = vmatprep.subr.mxu0 0.0
  %109 = vmatpush1.msra.mxu0 0.0
  %110 = vmatprep.subr.mxu0 0.0
  %111 = vmatpush1.msra.mxu0 0.0
  %112 = vmatprep.subr.mxu0 0.0
  %113 = vmatpush1.msra.mxu0 0.0
  %114 = vmatprep.subr.mxu0 0.0
  %115 = vmatpush1.msra.mxu0 0.0
  %116 = vmatprep.subr.mxu0 0.0
  %117 = vmatpush1.msra.mxu0 0.0
  %118 = vmatprep.subr.mxu0 0.0
  %119 = vmatpush1.msra.mxu0 0.0
  %120 = vmatprep.subr.mxu0 0.0
  %121 = vmatpush1.msra.mxu0 0.0
  %122 = vmatprep.subr.mxu0 0.0
  %123 = vmatpush1.msra.mxu0 0.0
  %124 = vmatprep.subr.mxu0 0.0
  %125 = vmatpush1.msra.mxu0 0.0
  %126 = vmatprep.subr.mxu0 0.0
  %127 = vmatpush1.msra.mxu0 0.0
  %128 = vmatprep.subr.mxu0 0.0
  %129 = vmatpush1.msra.mxu0 0.0
  %130 = vmatprep.subr.mxu0 0.0
  %131 = vmatpush1.msra.mxu0 0.0
  %132 = vmatprep.subr.mxu0 0.0
  %133 = vmatpush1.msra.mxu0 0.0
  %134 = vmatprep.subr.mxu0 0.0
  %135 = vmatpush1.msra.mxu0 0.0
  %136 = vmatprep.subr.mxu0 0.0
  %137 = vmatpush1.msra.mxu0 0.0
  %138 = vmatprep.subr.mxu0 0.0
  %139 = vmatpush1.msra.mxu0 0.0
  %140 = vmatprep.subr.mxu0 0.0
  %141 = vmatpush1.msra.mxu0 0.0
  %142 = vmatprep.subr.mxu0 0.0
  %143 = vmatpush1.msra.mxu0 0.0
  %144 = vmatprep.subr.mxu0 0.0
  %145 = vmatpush1.msra.mxu0 0.0
  %146 = vmatprep.subr.mxu0 0.0
  %147 = vmatpush1.msra.mxu0 0.0
  %148 = vmatprep.subr.mxu0 0.0
  %149 = vmatpush1.msra.mxu0 0.0
  %150 = vmatprep.subr.mxu0 0.0
  %151 = vmatpush1.msra.mxu0 0.0
  %152 = vmatprep.subr.mxu0 0.0
  %153 = vmatpush1.msra.mxu0 0.0
  %154 = vmatprep.subr.mxu0 0.0
  %155 = vmatpush1.msra.mxu0 0.0
  %156 = vmatprep.subr.mxu0 0.0
  %157 = vmatpush1.msra.mxu0 0.0
  %158 = vmatprep.subr.mxu0 0.0
  %159 = vmatpush1.msra.mxu0 0.0
  %160 = vmatprep.subr.mxu0 0.0
  %161 = vmatpush1.msra.mxu0 0.0
  %162 = vmatprep.mubr.f32.mxu0 0.0
  %163 = vmatmul.mubr.f32.gmra.mrb[0].mxu0 %v87
  %v164 = vpop.f32.mrb[0].mxu0
  %v165 = vadd.f32 0.0, %v164
  %v166 = vpop.f32.mrb[0].mxu0
  %v167 = vadd.f32 0.0, %v166
  %168 = vmatprep.mubr.f32.mxu0 0.0
  %169 = vmatmul.mubr.f32.gmra.mrb[0].mxu0 %v90
  %v170 = vpop.f32.mrb[0].mxu0
  %v171 = vadd.f32 0.0, %v170
  %v172 = vpop.f32.mrb[0].mxu0
  %v173 = vadd.f32 0.0, %v172
  %174 = vmatprep.mubr.f32.mxu0 0.0
  %175 = vmatmul.mubr.f32.gmra.mrb[0].mxu0 %v93
  %v176 = vpop.f32.mrb[0].mxu0
  %v177 = vadd.f32 0.0, %v176
  %v178 = vpop.f32.mrb[0].mxu0
  %v179 = vadd.f32 0.0, %v178
  %180 = vmatprep.mubr.f32.mxu0 0.0
  %181 = vmatmul.mubr.f32.gmra.mrb[0].mxu0 %v96
  %v182 = vpop.f32.mrb[0].mxu0
  %v183 = vadd.f32 0.0, %v182
  %v184 = vpop.f32.mrb[0].mxu0
  %v185 = vadd.f32 0.0, %v184
  %186 = vdwg.mxu0
  %187 = vmatprep.subr.mxu0 %v74
  %188 = vmatpush1.msra.mxu0 %v73
  %189 = vmatprep.subr.mxu0 %v79
  %190 = vmatpush1.msra.mxu0 %v78
  %191 = vmatprep.subr.mxu0 0.0
  %192 = vmatpush1.msra.mxu0 0.0
  %193 = vmatprep.subr.mxu0 0.0
  %194 = vmatpush1.msra.mxu0 0.0
  %195 = vmatprep.subr.mxu0 0.0
  %196 = vmatpush1.msra.mxu0 0.0
  %197 = vmatprep.subr.mxu0 0.0
  %198 = vmatpush1.msra.mxu0 0.0
  %199 = vmatprep.subr.mxu0 0.0
  %200 = vmatpush1.msra.mxu0 0.0
  %201 = vmatprep.subr.mxu0 0.0
  %202 = vmatpush1.msra.mxu0 0.0
  %203 = vmatprep.subr.mxu0 0.0
  %204 = vmatpush1.msra.mxu0 0.0
  %205 = vmatprep.subr.mxu0 0.0
  %206 = vmatpush1.msra.mxu0 0.0
  %207 = vmatprep.subr.mxu0 0.0
  %208 = vmatpush1.msra.mxu0 0.0
  %209 = vmatprep.subr.mxu0 0.0
  %210 = vmatpush1.msra.mxu0 0.0
  %211 = vmatprep.subr.mxu0 0.0
  %212 = vmatpush1.msra.mxu0 0.0
  %213 = vmatprep.subr.mxu0 0.0
  %214 = vmatpush1.msra.mxu0 0.0
  %215 = vmatprep.subr.mxu0 0.0
  %216 = vmatpush1.msra.mxu0 0.0
  %217 = vmatprep.subr.mxu0 0.0
  %218 = vmatpush1.msra.mxu0 0.0
  %219 = vmatprep.subr.mxu0 0.0
  %220 = vmatpush1.msra.mxu0 0.0
  %221 = vmatprep.subr.mxu0 0.0
  %222 = vmatpush1.msra.mxu0 0.0
  %223 = vmatprep.subr.mxu0 0.0
  %224 = vmatpush1.msra.mxu0 0.0
  %225 = vmatprep.subr.mxu0 0.0
  %226 = vmatpush1.msra.mxu0 0.0
  %227 = vmatprep.subr.mxu0 0.0
  %228 = vmatpush1.msra.mxu0 0.0
  %229 = vmatprep.subr.mxu0 0.0
  %230 = vmatpush1.msra.mxu0 0.0
  %231 = vmatprep.subr.mxu0 0.0
  %232 = vmatpush1.msra.mxu0 0.0
  %233 = vmatprep.subr.mxu0 0.0
  %234 = vmatpush1.msra.mxu0 0.0
  %235 = vmatprep.subr.mxu0 0.0
  %236 = vmatpush1.msra.mxu0 0.0
  %237 = vmatprep.subr.mxu0 0.0
  %238 = vmatpush1.msra.mxu0 0.0
  %239 = vmatprep.subr.mxu0 0.0
  %240 = vmatpush1.msra.mxu0 0.0
  %241 = vmatprep.subr.mxu0 0.0
  %242 = vmatpush1.msra.mxu0 0.0
  %243 = vmatprep.subr.mxu0 0.0
  %244 = vmatpush1.msra.mxu0 0.0
  %245 = vmatprep.subr.mxu0 0.0
  %246 = vmatpush1.msra.mxu0 0.0
  %247 = vmatprep.subr.mxu0 0.0
  %248 = vmatpush1.msra.mxu0 0.0
  %249 = vmatprep.subr.mxu0 0.0
  %250 = vmatpush1.msra.mxu0 0.0
  %251 = vmatprep.mubr.f32.mxu0 0.0
  %252 = vmatmul.mubr.f32.gmra.mrb[0].mxu0 %v87
  %v253 = vpop.f32.mrb[0].mxu0
  %v254 = vadd.f32 0.0, %v253
  %v255 = vpop.f32.mrb[0].mxu0
  %v256 = vadd.f32 0.0, %v255
  %257 = vmatprep.mubr.f32.mxu0 0.0
  %258 = vmatmul.mubr.f32.gmra.mrb[0].mxu0 %v90
  %v259 = vpop.f32.mrb[0].mxu0
  %v260 = vadd.f32 0.0, %v259
  %v261 = vpop.f32.mrb[0].mxu0
  %v262 = vadd.f32 0.0, %v261
  %263 = vmatprep.mubr.f32.mxu0 0.0
  %264 = vmatmul.mubr.f32.gmra.mrb[0].mxu0 %v93
  %v265 = vpop.f32.mrb[0].mxu0
  %v266 = vadd.f32 0.0, %v265
  %v267 = vpop.f32.mrb[0].mxu0
  %v268 = vadd.f32 0.0, %v267
  %269 = vmatprep.mubr.f32.mxu0 0.0
  %270 = vmatmul.mubr.f32.gmra.mrb[0].mxu0 %v96
  %v271 = vpop.f32.mrb[0].mxu0
  %v272 = vadd.f32 0.0, %v271
  %v273 = vpop.f32.mrb[0].mxu0
  %v274 = vadd.f32 0.0, %v273
  %275 = vdwg.mxu0
  %276 = vmatprep.subr.mxu0 0.0
  %277 = vmatpush1.msra.mxu0 %v75
  %278 = vmatprep.subr.mxu0 0.0
  %279 = vmatpush1.msra.mxu0 %v80
  %280 = vmatprep.subr.mxu0 0.0
  %281 = vmatpush1.msra.mxu0 0.0
  %282 = vmatprep.subr.mxu0 0.0
  %283 = vmatpush1.msra.mxu0 0.0
  %284 = vmatprep.subr.mxu0 0.0
  %285 = vmatpush1.msra.mxu0 0.0
  %286 = vmatprep.subr.mxu0 0.0
  %287 = vmatpush1.msra.mxu0 0.0
  %288 = vmatprep.subr.mxu0 0.0
  %289 = vmatpush1.msra.mxu0 0.0
  %290 = vmatprep.subr.mxu0 0.0
  %291 = vmatpush1.msra.mxu0 0.0
  %292 = vmatprep.subr.mxu0 0.0
  %293 = vmatpush1.msra.mxu0 0.0
  %294 = vmatprep.subr.mxu0 0.0
  %295 = vmatpush1.msra.mxu0 0.0
  %296 = vmatprep.subr.mxu0 0.0
  %297 = vmatpush1.msra.mxu0 0.0
  %298 = vmatprep.subr.mxu0 0.0
  %299 = vmatpush1.msra.mxu0 0.0
  %300 = vmatprep.subr.mxu0 0.0
  %301 = vmatpush1.msra.mxu0 0.0
  %302 = vmatprep.subr.mxu0 0.0
  %303 = vmatpush1.msra.mxu0 0.0
  %304 = vmatprep.subr.mxu0 0.0
  %305 = vmatpush1.msra.mxu0 0.0
  %306 = vmatprep.subr.mxu0 0.0
  %307 = vmatpush1.msra.mxu0 0.0
  %308 = vmatprep.subr.mxu0 0.0
  %309 = vmatpush1.msra.mxu0 0.0
  %310 = vmatprep.subr.mxu0 0.0
  %311 = vmatpush1.msra.mxu0 0.0
  %312 = vmatprep.subr.mxu0 0.0
  %313 = vmatpush1.msra.mxu0 0.0
  %314 = vmatprep.subr.mxu0 0.0
  %315 = vmatpush1.msra.mxu0 0.0
  %316 = vmatprep.subr.mxu0 0.0
  %317 = vmatpush1.msra.mxu0 0.0
  %318 = vmatprep.subr.mxu0 0.0
  %319 = vmatpush1.msra.mxu0 0.0
  %320 = vmatprep.subr.mxu0 0.0
  %321 = vmatpush1.msra.mxu0 0.0
  %322 = vmatprep.subr.mxu0 0.0
  %323 = vmatpush1.msra.mxu0 0.0
  %324 = vmatprep.subr.mxu0 0.0
  %325 = vmatpush1.msra.mxu0 0.0
  %326 = vmatprep.subr.mxu0 0.0
  %327 = vmatpush1.msra.mxu0 0.0
  %328 = vmatprep.subr.mxu0 0.0
  %329 = vmatpush1.msra.mxu0 0.0
  %330 = vmatprep.subr.mxu0 0.0
  %331 = vmatpush1.msra.mxu0 0.0
  %332 = vmatprep.subr.mxu0 0.0
  %333 = vmatpush1.msra.mxu0 0.0
  %334 = vmatprep.subr.mxu0 0.0
  %335 = vmatpush1.msra.mxu0 0.0
  %336 = vmatprep.subr.mxu0 0.0
  %337 = vmatpush1.msra.mxu0 0.0
  %338 = vmatprep.subr.mxu0 0.0
  %339 = vmatpush1.msra.mxu0 0.0
  %340 = vmatprep.mubr.f32.mxu0 0.0
  %341 = vmatmul.mubr.f32.gmra.mrb[0].mxu0 %v87
  %v342 = vpop.f32.mrb[0].mxu0
  %v343 = vadd.f32 0.0, %v342
  %v344 = vpop.f32.mrb[0].mxu0
  %345 = vmatprep.mubr.f32.mxu0 0.0
  %346 = vmatmul.mubr.f32.gmra.mrb[0].mxu0 %v90
  %v347 = vpop.f32.mrb[0].mxu0
  %v348 = vadd.f32 0.0, %v347
  %v349 = vpop.f32.mrb[0].mxu0
  %350 = vmatprep.mubr.f32.mxu0 0.0
  %351 = vmatmul.mubr.f32.gmra.mrb[0].mxu0 %v93
  %v352 = vpop.f32.mrb[0].mxu0
  %v353 = vadd.f32 0.0, %v352
  %v354 = vpop.f32.mrb[0].mxu0
  %355 = vmatprep.mubr.f32.mxu0 0.0
  %356 = vmatmul.mubr.f32.gmra.mrb[0].mxu0 %v96
  %v357 = vpop.f32.mrb[0].mxu0
  %v358 = vadd.f32 0.0, %v357
  %v359 = vpop.f32.mrb[0].mxu0
  %360 = vdwg.mxu0
  %361 = vst [vmem:[#allocation2] sm:$0xff] %v165
  %362 = vst [vmem:[#allocation2 + $0x8] sm:$0xff] %v167
  %363 = vst [vmem:[#allocation2 + $0x10] sm:$0xff] %v254
  %364 = vst [vmem:[#allocation2 + $0x18] sm:$0xff] %v256
  %365 = vst [vmem:[#allocation2 + $0x20] sm:$0xff] %v343
  %366 = vst [vmem:[#allocation2 + $0x28] sm:$0xff] %v171
  %367 = vst [vmem:[#allocation2 + $0x30] sm:$0xff] %v173
  %368 = vst [vmem:[#allocation2 + $0x38] sm:$0xff] %v260
  %369 = vst [vmem:[#allocation2 + $0x40] sm:$0xff] %v262
  %370 = vst [vmem:[#allocation2 + $0x48] sm:$0xff] %v348
  %371 = vst [vmem:[#allocation2 + $0x50] sm:$0xff] %v177
  %372 = vst [vmem:[#allocation2 + $0x58] sm:$0xff] %v179
  %373 = vst [vmem:[#allocation2 + $0x60] sm:$0xff] %v266
  %374 = vst [vmem:[#allocation2 + $0x68] sm:$0xff] %v268
  %375 = vst [vmem:[#allocation2 + $0x70] sm:$0xff] %v353
  %376 = vst [vmem:[#allocation2 + $0x78] sm:$0xff] %v183
  %377 = vst [vmem:[#allocation2 + $0x80] sm:$0xff] %v185
  %378 = vst [vmem:[#allocation2 + $0x88] sm:$0xff] %v272
  %379 = vst [vmem:[#allocation2 + $0x90] sm:$0xff] %v274
  %380 = vst [vmem:[#allocation2 + $0x98] sm:$0xff] %v358
  %v381 = vld [vmem:[#allocation2] sm:$0xff]
  %v382 = vld [vmem:[#allocation2 + $0x8] sm:$0xff]
  %v383 = vld [vmem:[#allocation2 + $0x10] sm:$0xff]
  %v384 = vld [vmem:[#allocation2 + $0x18] sm:$0xff]
  %v385 = vld [vmem:[#allocation2 + $0x28] sm:$0xff]
  %v386 = vld [vmem:[#allocation2 + $0x30] sm:$0xff]
  %v387 = vld [vmem:[#allocation2 + $0x38] sm:$0xff]
  %v388 = vld [vmem:[#allocation2 + $0x40] sm:$0xff]
  %v389 = vld [vmem:[#allocation2 + $0x50] sm:$0xff]
  %v390 = vld [vmem:[#allocation2 + $0x58] sm:$0xff]
  %v391 = vld [vmem:[#allocation2 + $0x60] sm:$0xff]
  %v392 = vld [vmem:[#allocation2 + $0x68] sm:$0xff]
  %v393 = vld [vmem:[#allocation2 + $0x78] sm:$0xff]
  %v394 = vld [vmem:[#allocation2 + $0x80] sm:$0xff]
  %v395 = vld [vmem:[#allocation2 + $0x88] sm:$0xff]
  %v396 = vld [vmem:[#allocation2 + $0x90] sm:$0xff]
  %397 = vst [vmem:[#allocation3] sm:$0xff] %v381
  %398 = vst [vmem:[#allocation3 + $0x8] sm:$0xff] %v382
  %399 = vst [vmem:[#allocation3 + $0x10] sm:$0xff] %v383
  %400 = vst [vmem:[#allocation3 + $0x18] sm:$0xff] %v384
  %401 = vst [vmem:[#allocation3 + $0x20] sm:$0xff] %v385
  %402 = vst [vmem:[#allocation3 + $0x28] sm:$0xff] %v386
  %403 = vst [vmem:[#allocation3 + $0x30] sm:$0xff] %v387
  %404 = vst [vmem:[#allocation3 + $0x38] sm:$0xff] %v388
  %405 = vst [vmem:[#allocation3 + $0x40] sm:$0xff] %v389
  %406 = vst [vmem:[#allocation3 + $0x48] sm:$0xff] %v390
  %407 = vst [vmem:[#allocation3 + $0x50] sm:$0xff] %v391
  %408 = vst [vmem:[#allocation3 + $0x58] sm:$0xff] %v392
  %409 = vst [vmem:[#allocation3 + $0x60] sm:$0xff] %v393
  %410 = vst [vmem:[#allocation3 + $0x68] sm:$0xff] %v394
  %411 = vst [vmem:[#allocation3 + $0x70] sm:$0xff] %v395
  %412 = vst [vmem:[#allocation3 + $0x78] sm:$0xff] %v396
  %v413 = vld [vmem:[#allocation2] sm:$0xff]
  %v414 = vld [vmem:[#allocation2 + $0x8] sm:$0xff]
  %v415 = vld [vmem:[#allocation2 + $0x10] sm:$0xff]
  %v416 = vld [vmem:[#allocation2 + $0x18] sm:$0xff]
  %v417 = vld [vmem:[#allocation2 + $0x20] sm:$0xff]
  %v418 = vld [vmem:[#allocation2 + $0x28] sm:$0xff]
  %v419 = vld [vmem:[#allocation2 + $0x30] sm:$0xff]
  %v420 = vld [vmem:[#allocation2 + $0x38] sm:$0xff]
  %v421 = vld [vmem:[#allocation2 + $0x40] sm:$0xff]
  %v422 = vld [vmem:[#allocation2 + $0x48] sm:$0xff]
  %v423 = vld [vmem:[#allocation2 + $0x50] sm:$0xff]
  %v424 = vld [vmem:[#allocation2 + $0x58] sm:$0xff]
  %v425 = vld [vmem:[#allocation2 + $0x60] sm:$0xff]
  %v426 = vld [vmem:[#allocation2 + $0x68] sm:$0xff]
  %v427 = vld [vmem:[#allocation2 + $0x70] sm:$0xff]
  %v428 = vld [vmem:[#allocation2 + $0x78] sm:$0xff]
  %v429 = vld [vmem:[#allocation2 + $0x80] sm:$0xff]
  %v430 = vld [vmem:[#allocation2 + $0x88] sm:$0xff]
  %v431 = vld [vmem:[#allocation2 + $0x90] sm:$0xff]
  %v432 = vld [vmem:[#allocation2 + $0x98] sm:$0xff]
  %453 = vrot.lane.b32.xlu0 %v413, 127
  %v454 = vpop.permute.xlu0 %453
  %455 = vrot.lane.b32.xlu0 %v414, 127
  %v456 = vpop.permute.xlu0 %455
  %457 = vrot.lane.b32.xlu0 %v415, 127
  %v458 = vpop.permute.xlu0 %457
  %459 = vrot.lane.b32.xlu0 %v416, 127
  %v460 = vpop.permute.xlu0 %459
  %461 = vrot.lane.b32.xlu0 %v417, 127
  %v462 = vpop.permute.xlu0 %461
  %463 = vrot.lane.b32.xlu0 %v418, 127
  %v464 = vpop.permute.xlu0 %463
  %465 = vrot.lane.b32.xlu0 %v419, 127
  %v466 = vpop.permute.xlu0 %465
  %467 = vrot.lane.b32.xlu0 %v420, 127
  %v468 = vpop.permute.xlu0 %467
  %469 = vrot.lane.b32.xlu0 %v421, 127
  %v470 = vpop.permute.xlu0 %469
  %471 = vrot.lane.b32.xlu0 %v422, 127
  %v472 = vpop.permute.xlu0 %471
  %473 = vrot.lane.b32.xlu0 %v423, 127
  %v474 = vpop.permute.xlu0 %473
  %475 = vrot.lane.b32.xlu0 %v424, 127
  %v476 = vpop.permute.xlu0 %475
  %477 = vrot.lane.b32.xlu0 %v425, 127
  %v478 = vpop.permute.xlu0 %477
  %479 = vrot.lane.b32.xlu0 %v426, 127
  %v480 = vpop.permute.xlu0 %479
  %481 = vrot.lane.b32.xlu0 %v427, 127
  %v482 = vpop.permute.xlu0 %481
  %483 = vrot.lane.b32.xlu0 %v428, 127
  %v484 = vpop.permute.xlu0 %483
  %485 = vrot.lane.b32.xlu0 %v429, 127
  %v486 = vpop.permute.xlu0 %485
  %487 = vrot.lane.b32.xlu0 %v430, 127
  %v488 = vpop.permute.xlu0 %487
  %489 = vrot.lane.b32.xlu0 %v431, 127
  %v490 = vpop.permute.xlu0 %489
  %491 = vrot.lane.b32.xlu0 %v432, 127
  %v492 = vpop.permute.xlu0 %491
  %vm493 = vcmask 1039360
  %v494 = vsel %vm493, %v454, %v456
  %v495 = vsel %vm493, %v456, %v458
  %v496 = vsel %vm493, %v458, %v460
  %v497 = vsel %vm493, %v460, %v462
  %v498 = vsel %vm493, %v464, %v466
  %v499 = vsel %vm493, %v466, %v468
  %v500 = vsel %vm493, %v468, %v470
  %v501 = vsel %vm493, %v470, %v472
  %v502 = vsel %vm493, %v474, %v476
  %v503 = vsel %vm493, %v476, %v478
  %v504 = vsel %vm493, %v478, %v480
  %v505 = vsel %vm493, %v480, %v482
  %v506 = vsel %vm493, %v484, %v486
  %v507 = vsel %vm493, %v486, %v488
  %v508 = vsel %vm493, %v488, %v490
  %v509 = vsel %vm493, %v490, %v492
  %526 = vst [vmem:[#allocation3 + $0x80] sm:$0xff] %v494
  %527 = vst [vmem:[#allocation3 + $0x88] sm:$0xff] %v495
  %528 = vst [vmem:[#allocation3 + $0x90] sm:$0xff] %v496
  %529 = vst [vmem:[#allocation3 + $0x98] sm:$0xff] %v497
  %530 = vst [vmem:[#allocation3 + $0xa0] sm:$0xff] %v498
  %531 = vst [vmem:[#allocation3 + $0xa8] sm:$0xff] %v499
  %532 = vst [vmem:[#allocation3 + $0xb0] sm:$0xff] %v500
  %533 = vst [vmem:[#allocation3 + $0xb8] sm:$0xff] %v501
  %534 = vst [vmem:[#allocation3 + $0xc0] sm:$0xff] %v502
  %535 = vst [vmem:[#allocation3 + $0xc8] sm:$0xff] %v503
  %536 = vst [vmem:[#allocation3 + $0xd0] sm:$0xff] %v504
  %537 = vst [vmem:[#allocation3 + $0xd8] sm:$0xff] %v505
  %538 = vst [vmem:[#allocation3 + $0xe0] sm:$0xff] %v506
  %539 = vst [vmem:[#allocation3 + $0xe8] sm:$0xff] %v507
  %540 = vst [vmem:[#allocation3 + $0xf0] sm:$0xff] %v508
  %541 = vst [vmem:[#allocation3 + $0xf8] sm:$0xff] %v509
  %v542 = vld [vmem:[#allocation2] sm:$0xff]
  %v543 = vld [vmem:[#allocation2 + $0x8] sm:$0xff]
  %v544 = vld [vmem:[#allocation2 + $0x10] sm:$0xff]
  %v545 = vld [vmem:[#allocation2 + $0x18] sm:$0xff]
  %v546 = vld [vmem:[#allocation2 + $0x20] sm:$0xff]
  %v547 = vld [vmem:[#allocation2 + $0x28] sm:$0xff]
  %v548 = vld [vmem:[#allocation2 + $0x30] sm:$0xff]
  %v549 = vld [vmem:[#allocation2 + $0x38] sm:$0xff]
  %v550 = vld [vmem:[#allocation2 + $0x40] sm:$0xff]
  %v551 = vld [vmem:[#allocation2 + $0x48] sm:$0xff]
  %v552 = vld [vmem:[#allocation2 + $0x50] sm:$0xff]
  %v553 = vld [vmem:[#allocation2 + $0x58] sm:$0xff]
  %v554 = vld [vmem:[#allocation2 + $0x60] sm:$0xff]
  %v555 = vld [vmem:[#allocation2 + $0x68] sm:$0xff]
  %v556 = vld [vmem:[#allocation2 + $0x70] sm:$0xff]
  %v557 = vld [vmem:[#allocation2 + $0x78] sm:$0xff]
  %v558 = vld [vmem:[#allocation2 + $0x80] sm:$0xff]
  %v559 = vld [vmem:[#allocation2 + $0x88] sm:$0xff]
  %v560 = vld [vmem:[#allocation2 + $0x90] sm:$0xff]
  %v561 = vld [vmem:[#allocation2 + $0x98] sm:$0xff]
  %582 = vrot.lane.b32.xlu0 %v542, 126
  %v583 = vpop.permute.xlu0 %582
  %584 = vrot.lane.b32.xlu0 %v543, 126
  %v585 = vpop.permute.xlu0 %584
  %586 = vrot.lane.b32.xlu0 %v544, 126
  %v587 = vpop.permute.xlu0 %586
  %588 = vrot.lane.b32.xlu0 %v545, 126
  %v589 = vpop.permute.xlu0 %588
  %590 = vrot.lane.b32.xlu0 %v546, 126
  %v591 = vpop.permute.xlu0 %590
  %592 = vrot.lane.b32.xlu0 %v547, 126
  %v593 = vpop.permute.xlu0 %592
  %594 = vrot.lane.b32.xlu0 %v548, 126
  %v595 = vpop.permute.xlu0 %594
  %596 = vrot.lane.b32.xlu0 %v549, 126
  %v597 = vpop.permute.xlu0 %596
  %598 = vrot.lane.b32.xlu0 %v550, 126
  %v599 = vpop.permute.xlu0 %598
  %600 = vrot.lane.b32.xlu0 %v551, 126
  %v601 = vpop.permute.xlu0 %600
  %602 = vrot.lane.b32.xlu0 %v552, 126
  %v603 = vpop.permute.xlu0 %602
  %604 = vrot.lane.b32.xlu0 %v553, 126
  %v605 = vpop.permute.xlu0 %604
  %606 = vrot.lane.b32.xlu0 %v554, 126
  %v607 = vpop.permute.xlu0 %606
  %608 = vrot.lane.b32.xlu0 %v555, 126
  %v609 = vpop.permute.xlu0 %608
  %610 = vrot.lane.b32.xlu0 %v556, 126
  %v611 = vpop.permute.xlu0 %610
  %612 = vrot.lane.b32.xlu0 %v557, 126
  %v613 = vpop.permute.xlu0 %612
  %614 = vrot.lane.b32.xlu0 %v558, 126
  %v615 = vpop.permute.xlu0 %614
  %616 = vrot.lane.b32.xlu0 %v559, 126
  %v617 = vpop.permute.xlu0 %616
  %618 = vrot.lane.b32.xlu0 %v560, 126
  %v619 = vpop.permute.xlu0 %618
  %620 = vrot.lane.b32.xlu0 %v561, 126
  %v621 = vpop.permute.xlu0 %620
  %vm622 = vcmask 1031168
  %v623 = vsel %vm622, %v583, %v585
  %v624 = vsel %vm622, %v585, %v587
  %v625 = vsel %vm622, %v587, %v589
  %v626 = vsel %vm622, %v589, %v591
  %v627 = vsel %vm622, %v593, %v595
  %v628 = vsel %vm622, %v595, %v597
  %v629 = vsel %vm622, %v597, %v599
  %v630 = vsel %vm622, %v599, %v601
  %v631 = vsel %vm622, %v603, %v605
  %v632 = vsel %vm622, %v605, %v607
  %v633 = vsel %vm622, %v607, %v609
  %v634 = vsel %vm622, %v609, %v611
  %v635 = vsel %vm622, %v613, %v615
  %v636 = vsel %vm622, %v615, %v617
  %v637 = vsel %vm622, %v617, %v619
  %v638 = vsel %vm622, %v619, %v621
  %655 = vst [vmem:[#allocation3 + $0x100] sm:$0xff] %v623
  %656 = vst [vmem:[#allocation3 + $0x108] sm:$0xff] %v624
  %657 = vst [vmem:[#allocation3 + $0x110] sm:$0xff] %v625
  %658 = vst [vmem:[#allocation3 + $0x118] sm:$0xff] %v626
  %659 = vst [vmem:[#allocation3 + $0x120] sm:$0xff] %v627
  %660 = vst [vmem:[#allocation3 + $0x128] sm:$0xff] %v628
  %661 = vst [vmem:[#allocation3 + $0x130] sm:$0xff] %v629
  %662 = vst [vmem:[#allocation3 + $0x138] sm:$0xff] %v630
  %663 = vst [vmem:[#allocation3 + $0x140] sm:$0xff] %v631
  %664 = vst [vmem:[#allocation3 + $0x148] sm:$0xff] %v632
  %665 = vst [vmem:[#allocation3 + $0x150] sm:$0xff] %v633
  %666 = vst [vmem:[#allocation3 + $0x158] sm:$0xff] %v634
  %667 = vst [vmem:[#allocation3 + $0x160] sm:$0xff] %v635
  %668 = vst [vmem:[#allocation3 + $0x168] sm:$0xff] %v636
  %669 = vst [vmem:[#allocation3 + $0x170] sm:$0xff] %v637
  %670 = vst [vmem:[#allocation3 + $0x178] sm:$0xff] %v638
  %v671 = vld [vmem:[#allocation2] sm:$0xff]
  %v672 = vld [vmem:[#allocation2 + $0x8] sm:$0xff]
  %v673 = vld [vmem:[#allocation2 + $0x10] sm:$0xff]
  %v674 = vld [vmem:[#allocation2 + $0x18] sm:$0xff]
  %v675 = vld [vmem:[#allocation2 + $0x20] sm:$0xff]
  %v676 = vld [vmem:[#allocation2 + $0x28] sm:$0xff]
  %v677 = vld [vmem:[#allocation2 + $0x30] sm:$0xff]
  %v678 = vld [vmem:[#allocation2 + $0x38] sm:$0xff]
  %v679 = vld [vmem:[#allocation2 + $0x40] sm:$0xff]
  %v680 = vld [vmem:[#allocation2 + $0x48] sm:$0xff]
  %v681 = vld [vmem:[#allocation2 + $0x50] sm:$0xff]
  %v682 = vld [vmem:[#allocation2 + $0x58] sm:$0xff]
  %v683 = vld [vmem:[#allocation2 + $0x60] sm:$0xff]
  %v684 = vld [vmem:[#allocation2 + $0x68] sm:$0xff]
  %v685 = vld [vmem:[#allocation2 + $0x70] sm:$0xff]
  %v686 = vld [vmem:[#allocation2 + $0x78] sm:$0xff]
  %v687 = vld [vmem:[#allocation2 + $0x80] sm:$0xff]
  %v688 = vld [vmem:[#allocation2 + $0x88] sm:$0xff]
  %v689 = vld [vmem:[#allocation2 + $0x90] sm:$0xff]
  %v690 = vld [vmem:[#allocation2 + $0x98] sm:$0xff]
  %711 = vrot.lane.b32.xlu0 %v671, 115
  %v712 = vpop.permute.xlu0 %711
  %713 = vrot.lane.b32.xlu0 %v672, 115
  %v714 = vpop.permute.xlu0 %713
  %715 = vrot.lane.b32.xlu0 %v673, 115
  %v716 = vpop.permute.xlu0 %715
  %717 = vrot.lane.b32.xlu0 %v674, 115
  %v718 = vpop.permute.xlu0 %717
  %719 = vrot.lane.b32.xlu0 %v675, 115
  %v720 = vpop.permute.xlu0 %719
  %721 = vrot.lane.b32.xlu0 %v676, 115
  %v722 = vpop.permute.xlu0 %721
  %723 = vrot.lane.b32.xlu0 %v677, 115
  %v724 = vpop.permute.xlu0 %723
  %725 = vrot.lane.b32.xlu0 %v678, 115
  %v726 = vpop.permute.xlu0 %725
  %727 = vrot.lane.b32.xlu0 %v679, 115
  %v728 = vpop.permute.xlu0 %727
  %729 = vrot.lane.b32.xlu0 %v680, 115
  %v730 = vpop.permute.xlu0 %729
  %731 = vrot.lane.b32.xlu0 %v681, 115
  %v732 = vpop.permute.xlu0 %731
  %733 = vrot.lane.b32.xlu0 %v682, 115
  %v734 = vpop.permute.xlu0 %733
  %735 = vrot.lane.b32.xlu0 %v683, 115
  %v736 = vpop.permute.xlu0 %735
  %737 = vrot.lane.b32.xlu0 %v684, 115
  %v738 = vpop.permute.xlu0 %737
  %739 = vrot.lane.b32.xlu0 %v685, 115
  %v740 = vpop.permute.xlu0 %739
  %741 = vrot.lane.b32.xlu0 %v686, 115
  %v742 = vpop.permute.xlu0 %741
  %743 = vrot.lane.b32.xlu0 %v687, 115
  %v744 = vpop.permute.xlu0 %743
  %745 = vrot.lane.b32.xlu0 %v688, 115
  %v746 = vpop.permute.xlu0 %745
  %747 = vrot.lane.b32.xlu0 %v689, 115
  %v748 = vpop.permute.xlu0 %747
  %749 = vrot.lane.b32.xlu0 %v690, 115
  %v750 = vpop.permute.xlu0 %749
  %vm751 = vcmask 941056
  %v752 = vsel %vm751, %v712, %v714
  %v753 = vsel %vm751, %v714, %v716
  %v754 = vsel %vm751, %v716, %v718
  %v755 = vsel %vm751, %v718, %v720
  %v756 = vsel %vm751, %v722, %v724
  %v757 = vsel %vm751, %v724, %v726
  %v758 = vsel %vm751, %v726, %v728
  %v759 = vsel %vm751, %v728, %v730
  %v760 = vsel %vm751, %v732, %v734
  %v761 = vsel %vm751, %v734, %v736
  %v762 = vsel %vm751, %v736, %v738
  %v763 = vsel %vm751, %v738, %v740
  %v764 = vsel %vm751, %v742, %v744
  %v765 = vsel %vm751, %v744, %v746
  %v766 = vsel %vm751, %v746, %v748
  %v767 = vsel %vm751, %v748, %v750
  %784 = vst [vmem:[#allocation3 + $0x180] sm:$0xff] %v752
  %785 = vst [vmem:[#allocation3 + $0x188] sm:$0xff] %v753
  %786 = vst [vmem:[#allocation3 + $0x190] sm:$0xff] %v754
  %787 = vst [vmem:[#allocation3 + $0x198] sm:$0xff] %v755
  %788 = vst [vmem:[#allocation3 + $0x1a0] sm:$0xff] %v756
  %789 = vst [vmem:[#allocation3 + $0x1a8] sm:$0xff] %v757
  %790 = vst [vmem:[#allocation3 + $0x1b0] sm:$0xff] %v758
  %791 = vst [vmem:[#allocation3 + $0x1b8] sm:$0xff] %v759
  %792 = vst [vmem:[#allocation3 + $0x1c0] sm:$0xff] %v760
  %793 = vst [vmem:[#allocation3 + $0x1c8] sm:$0xff] %v761
  %794 = vst [vmem:[#allocation3 + $0x1d0] sm:$0xff] %v762
  %795 = vst [vmem:[#allocation3 + $0x1d8] sm:$0xff] %v763
  %796 = vst [vmem:[#allocation3 + $0x1e0] sm:$0xff] %v764
  %797 = vst [vmem:[#allocation3 + $0x1e8] sm:$0xff] %v765
  %798 = vst [vmem:[#allocation3 + $0x1f0] sm:$0xff] %v766
  %799 = vst [vmem:[#allocation3 + $0x1f8] sm:$0xff] %v767
  %v800 = vld [vmem:[#allocation2] sm:$0xff]
  %v801 = vld [vmem:[#allocation2 + $0x8] sm:$0xff]
  %v802 = vld [vmem:[#allocation2 + $0x10] sm:$0xff]
  %v803 = vld [vmem:[#allocation2 + $0x18] sm:$0xff]
  %v804 = vld [vmem:[#allocation2 + $0x20] sm:$0xff]
  %v805 = vld [vmem:[#allocation2 + $0x28] sm:$0xff]
  %v806 = vld [vmem:[#allocation2 + $0x30] sm:$0xff]
  %v807 = vld [vmem:[#allocation2 + $0x38] sm:$0xff]
  %v808 = vld [vmem:[#allocation2 + $0x40] sm:$0xff]
  %v809 = vld [vmem:[#allocation2 + $0x48] sm:$0xff]
  %v810 = vld [vmem:[#allocation2 + $0x50] sm:$0xff]
  %v811 = vld [vmem:[#allocation2 + $0x58] sm:$0xff]
  %v812 = vld [vmem:[#allocation2 + $0x60] sm:$0xff]
  %v813 = vld [vmem:[#allocation2 + $0x68] sm:$0xff]
  %v814 = vld [vmem:[#allocation2 + $0x70] sm:$0xff]
  %v815 = vld [vmem:[#allocation2 + $0x78] sm:$0xff]
  %v816 = vld [vmem:[#allocation2 + $0x80] sm:$0xff]
  %v817 = vld [vmem:[#allocation2 + $0x88] sm:$0xff]
  %v818 = vld [vmem:[#allocation2 + $0x90] sm:$0xff]
  %v819 = vld [vmem:[#allocation2 + $0x98] sm:$0xff]
  %840 = vrot.lane.b32.xlu0 %v800, 114
  %v841 = vpop.permute.xlu0 %840
  %842 = vrot.lane.b32.xlu0 %v801, 114
  %v843 = vpop.permute.xlu0 %842
  %844 = vrot.lane.b32.xlu0 %v802, 114
  %v845 = vpop.permute.xlu0 %844
  %846 = vrot.lane.b32.xlu0 %v803, 114
  %v847 = vpop.permute.xlu0 %846
  %848 = vrot.lane.b32.xlu0 %v804, 114
  %v849 = vpop.permute.xlu0 %848
  %850 = vrot.lane.b32.xlu0 %v805, 114
  %v851 = vpop.permute.xlu0 %850
  %852 = vrot.lane.b32.xlu0 %v806, 114
  %v853 = vpop.permute.xlu0 %852
  %854 = vrot.lane.b32.xlu0 %v807, 114
  %v855 = vpop.permute.xlu0 %854
  %856 = vrot.lane.b32.xlu0 %v808, 114
  %v857 = vpop.permute.xlu0 %856
  %858 = vrot.lane.b32.xlu0 %v809, 114
  %v859 = vpop.permute.xlu0 %858
  %860 = vrot.lane.b32.xlu0 %v810, 114
  %v861 = vpop.permute.xlu0 %860
  %862 = vrot.lane.b32.xlu0 %v811, 114
  %v863 = vpop.permute.xlu0 %862
  %864 = vrot.lane.b32.xlu0 %v812, 114
  %v865 = vpop.permute.xlu0 %864
  %866 = vrot.lane.b32.xlu0 %v813, 114
  %v867 = vpop.permute.xlu0 %866
  %868 = vrot.lane.b32.xlu0 %v814, 114
  %v869 = vpop.permute.xlu0 %868
  %870 = vrot.lane.b32.xlu0 %v815, 114
  %v871 = vpop.permute.xlu0 %870
  %872 = vrot.lane.b32.xlu0 %v816, 114
  %v873 = vpop.permute.xlu0 %872
  %874 = vrot.lane.b32.xlu0 %v817, 114
  %v875 = vpop.permute.xlu0 %874
  %876 = vrot.lane.b32.xlu0 %v818, 114
  %v877 = vpop.permute.xlu0 %876
  %878 = vrot.lane.b32.xlu0 %v819, 114
  %v879 = vpop.permute.xlu0 %878
  %vm880 = vcmask 932864
  %v881 = vsel %vm880, %v841, %v843
  %v882 = vsel %vm880, %v843, %v845
  %v883 = vsel %vm880, %v845, %v847
  %v884 = vsel %vm880, %v847, %v849
  %v885 = vsel %vm880, %v851, %v853
  %v886 = vsel %vm880, %v853, %v855
  %v887 = vsel %vm880, %v855, %v857
  %v888 = vsel %vm880, %v857, %v859
  %v889 = vsel %vm880, %v861, %v863
  %v890 = vsel %vm880, %v863, %v865
  %v891 = vsel %vm880, %v865, %v867
  %v892 = vsel %vm880, %v867, %v869
  %v893 = vsel %vm880, %v871, %v873
  %v894 = vsel %vm880, %v873, %v875
  %v895 = vsel %vm880, %v875, %v877
  %v896 = vsel %vm880, %v877, %v879
  %913 = vst [vmem:[#allocation3 + $0x200] sm:$0xff] %v881
  %914 = vst [vmem:[#allocation3 + $0x208] sm:$0xff] %v882
  %915 = vst [vmem:[#allocation3 + $0x210] sm:$0xff] %v883
  %916 = vst [vmem:[#allocation3 + $0x218] sm:$0xff] %v884
  %917 = vst [vmem:[#allocation3 + $0x220] sm:$0xff] %v885
  %918 = vst [vmem:[#allocation3 + $0x228] sm:$0xff] %v886
  %919 = vst [vmem:[#allocation3 + $0x230] sm:$0xff] %v887
  %920 = vst [vmem:[#allocation3 + $0x238] sm:$0xff] %v888
  %921 = vst [vmem:[#allocation3 + $0x240] sm:$0xff] %v889
  %922 = vst [vmem:[#allocation3 + $0x248] sm:$0xff] %v890
  %923 = vst [vmem:[#allocation3 + $0x250] sm:$0xff] %v891
  %924 = vst [vmem:[#allocation3 + $0x258] sm:$0xff] %v892
  %925 = vst [vmem:[#allocation3 + $0x260] sm:$0xff] %v893
  %926 = vst [vmem:[#allocation3 + $0x268] sm:$0xff] %v894
  %927 = vst [vmem:[#allocation3 + $0x270] sm:$0xff] %v895
  %928 = vst [vmem:[#allocation3 + $0x278] sm:$0xff] %v896
  %v929 = vld [vmem:[#allocation2] sm:$0xff]
  %v930 = vld [vmem:[#allocation2 + $0x8] sm:$0xff]
  %v931 = vld [vmem:[#allocation2 + $0x10] sm:$0xff]
  %v932 = vld [vmem:[#allocation2 + $0x18] sm:$0xff]
  %v933 = vld [vmem:[#allocation2 + $0x20] sm:$0xff]
  %v934 = vld [vmem:[#allocation2 + $0x28] sm:$0xff]
  %v935 = vld [vmem:[#allocation2 + $0x30] sm:$0xff]
  %v936 = vld [vmem:[#allocation2 + $0x38] sm:$0xff]
  %v937 = vld [vmem:[#allocation2 + $0x40] sm:$0xff]
  %v938 = vld [vmem:[#allocation2 + $0x48] sm:$0xff]
  %v939 = vld [vmem:[#allocation2 + $0x50] sm:$0xff]
  %v940 = vld [vmem:[#allocation2 + $0x58] sm:$0xff]
  %v941 = vld [vmem:[#allocation2 + $0x60] sm:$0xff]
  %v942 = vld [vmem:[#allocation2 + $0x68] sm:$0xff]
  %v943 = vld [vmem:[#allocation2 + $0x70] sm:$0xff]
  %v944 = vld [vmem:[#allocation2 + $0x78] sm:$0xff]
  %v945 = vld [vmem:[#allocation2 + $0x80] sm:$0xff]
  %v946 = vld [vmem:[#allocation2 + $0x88] sm:$0xff]
  %v947 = vld [vmem:[#allocation2 + $0x90] sm:$0xff]
  %v948 = vld [vmem:[#allocation2 + $0x98] sm:$0xff]
  %969 = vrot.lane.b32.xlu0 %v929, 113
  %v970 = vpop.permute.xlu0 %969
  %971 = vrot.lane.b32.xlu0 %v930, 113
  %v972 = vpop.permute.xlu0 %971
  %973 = vrot.lane.b32.xlu0 %v931, 113
  %v974 = vpop.permute.xlu0 %973
  %975 = vrot.lane.b32.xlu0 %v932, 113
  %v976 = vpop.permute.xlu0 %975
  %977 = vrot.lane.b32.xlu0 %v933, 113
  %v978 = vpop.permute.xlu0 %977
  %979 = vrot.lane.b32.xlu0 %v934, 113
  %v980 = vpop.permute.xlu0 %979
  %981 = vrot.lane.b32.xlu0 %v935, 113
  %v982 = vpop.permute.xlu0 %981
  %983 = vrot.lane.b32.xlu0 %v936, 113
  %v984 = vpop.permute.xlu0 %983
  %985 = vrot.lane.b32.xlu0 %v937, 113
  %v986 = vpop.permute.xlu0 %985
  %987 = vrot.lane.b32.xlu0 %v938, 113
  %v988 = vpop.permute.xlu0 %987
  %989 = vrot.lane.b32.xlu0 %v939, 113
  %v990 = vpop.permute.xlu0 %989
  %991 = vrot.lane.b32.xlu0 %v940, 113
  %v992 = vpop.permute.xlu0 %991
  %993 = vrot.lane.b32.xlu0 %v941, 113
  %v994 = vpop.permute.xlu0 %993
  %995 = vrot.lane.b32.xlu0 %v942, 113
  %v996 = vpop.permute.xlu0 %995
  %997 = vrot.lane.b32.xlu0 %v943, 113
  %v998 = vpop.permute.xlu0 %997
  %999 = vrot.lane.b32.xlu0 %v944, 113
  %v1000 = vpop.permute.xlu0 %999
  %1001 = vrot.lane.b32.xlu0 %v945, 113
  %v1002 = vpop.permute.xlu0 %1001
  %1003 = vrot.lane.b32.xlu0 %v946, 113
  %v1004 = vpop.permute.xlu0 %1003
  %1005 = vrot.lane.b32.xlu0 %v947, 113
  %v1006 = vpop.permute.xlu0 %1005
  %1007 = vrot.lane.b32.xlu0 %v948, 113
  %v1008 = vpop.permute.xlu0 %1007
  %vm1009 = vcmask 924672
  %v1010 = vsel %vm1009, %v970, %v972
  %v1011 = vsel %vm1009, %v972, %v974
  %v1012 = vsel %vm1009, %v974, %v976
  %v1013 = vsel %vm1009, %v976, %v978
  %v1014 = vsel %vm1009, %v980, %v982
  %v1015 = vsel %vm1009, %v982, %v984
  %v1016 = vsel %vm1009, %v984, %v986
  %v1017 = vsel %vm1009, %v986, %v988
  %v1018 = vsel %vm1009, %v990, %v992
  %v1019 = vsel %vm1009, %v992, %v994
  %v1020 = vsel %vm1009, %v994, %v996
  %v1021 = vsel %vm1009, %v996, %v998
  %v1022 = vsel %vm1009, %v1000, %v1002
  %v1023 = vsel %vm1009, %v1002, %v1004
  %v1024 = vsel %vm1009, %v1004, %v1006
  %v1025 = vsel %vm1009, %v1006, %v1008
  %1042 = vst [vmem:[#allocation3 + $0x280] sm:$0xff] %v1010
  %1043 = vst [vmem:[#allocation3 + $0x288] sm:$0xff] %v1011
  %1044 = vst [vmem:[#allocation3 + $0x290] sm:$0xff] %v1012
  %1045 = vst [vmem:[#allocation3 + $0x298] sm:$0xff] %v1013
  %1046 = vst [vmem:[#allocation3 + $0x2a0] sm:$0xff] %v1014
  %1047 = vst [vmem:[#allocation3 + $0x2a8] sm:$0xff] %v1015
  %1048 = vst [vmem:[#allocation3 + $0x2b0] sm:$0xff] %v1016
  %1049 = vst [vmem:[#allocation3 + $0x2b8] sm:$0xff] %v1017
  %1050 = vst [vmem:[#allocation3 + $0x2c0] sm:$0xff] %v1018
  %1051 = vst [vmem:[#allocation3 + $0x2c8] sm:$0xff] %v1019
  %1052 = vst [vmem:[#allocation3 + $0x2d0] sm:$0xff] %v1020
  %1053 = vst [vmem:[#allocation3 + $0x2d8] sm:$0xff] %v1021
  %1054 = vst [vmem:[#allocation3 + $0x2e0] sm:$0xff] %v1022
  %1055 = vst [vmem:[#allocation3 + $0x2e8] sm:$0xff] %v1023
  %1056 = vst [vmem:[#allocation3 + $0x2f0] sm:$0xff] %v1024
  %1057 = vst [vmem:[#allocation3 + $0x2f8] sm:$0xff] %v1025
  %v1058 = vld [vmem:[#allocation2] sm:$0xff]
  %v1059 = vld [vmem:[#allocation2 + $0x8] sm:$0xff]
  %v1060 = vld [vmem:[#allocation2 + $0x10] sm:$0xff]
  %v1061 = vld [vmem:[#allocation2 + $0x18] sm:$0xff]
  %v1062 = vld [vmem:[#allocation2 + $0x20] sm:$0xff]
  %v1063 = vld [vmem:[#allocation2 + $0x28] sm:$0xff]
  %v1064 = vld [vmem:[#allocation2 + $0x30] sm:$0xff]
  %v1065 = vld [vmem:[#allocation2 + $0x38] sm:$0xff]
  %v1066 = vld [vmem:[#allocation2 + $0x40] sm:$0xff]
  %v1067 = vld [vmem:[#allocation2 + $0x48] sm:$0xff]
  %v1068 = vld [vmem:[#allocation2 + $0x50] sm:$0xff]
  %v1069 = vld [vmem:[#allocation2 + $0x58] sm:$0xff]
  %v1070 = vld [vmem:[#allocation2 + $0x60] sm:$0xff]
  %v1071 = vld [vmem:[#allocation2 + $0x68] sm:$0xff]
  %v1072 = vld [vmem:[#allocation2 + $0x70] sm:$0xff]
  %v1073 = vld [vmem:[#allocation2 + $0x78] sm:$0xff]
  %v1074 = vld [vmem:[#allocation2 + $0x80] sm:$0xff]
  %v1075 = vld [vmem:[#allocation2 + $0x88] sm:$0xff]
  %v1076 = vld [vmem:[#allocation2 + $0x90] sm:$0xff]
  %v1077 = vld [vmem:[#allocation2 + $0x98] sm:$0xff]
  %1098 = vrot.lane.b32.xlu0 %v1058, 102
  %v1099 = vpop.permute.xlu0 %1098
  %1100 = vrot.lane.b32.xlu0 %v1059, 102
  %v1101 = vpop.permute.xlu0 %1100
  %1102 = vrot.lane.b32.xlu0 %v1060, 102
  %v1103 = vpop.permute.xlu0 %1102
  %1104 = vrot.lane.b32.xlu0 %v1061, 102
  %v1105 = vpop.permute.xlu0 %1104
  %1106 = vrot.lane.b32.xlu0 %v1062, 102
  %v1107 = vpop.permute.xlu0 %1106
  %1108 = vrot.lane.b32.xlu0 %v1063, 102
  %v1109 = vpop.permute.xlu0 %1108
  %1110 = vrot.lane.b32.xlu0 %v1064, 102
  %v1111 = vpop.permute.xlu0 %1110
  %1112 = vrot.lane.b32.xlu0 %v1065, 102
  %v1113 = vpop.permute.xlu0 %1112
  %1114 = vrot.lane.b32.xlu0 %v1066, 102
  %v1115 = vpop.permute.xlu0 %1114
  %1116 = vrot.lane.b32.xlu0 %v1067, 102
  %v1117 = vpop.permute.xlu0 %1116
  %1118 = vrot.lane.b32.xlu0 %v1068, 102
  %v1119 = vpop.permute.xlu0 %1118
  %1120 = vrot.lane.b32.xlu0 %v1069, 102
  %v1121 = vpop.permute.xlu0 %1120
  %1122 = vrot.lane.b32.xlu0 %v1070, 102
  %v1123 = vpop.permute.xlu0 %1122
  %1124 = vrot.lane.b32.xlu0 %v1071, 102
  %v1125 = vpop.permute.xlu0 %1124
  %1126 = vrot.lane.b32.xlu0 %v1072, 102
  %v1127 = vpop.permute.xlu0 %1126
  %1128 = vrot.lane.b32.xlu0 %v1073, 102
  %v1129 = vpop.permute.xlu0 %1128
  %1130 = vrot.lane.b32.xlu0 %v1074, 102
  %v1131 = vpop.permute.xlu0 %1130
  %1132 = vrot.lane.b32.xlu0 %v1075, 102
  %v1133 = vpop.permute.xlu0 %1132
  %1134 = vrot.lane.b32.xlu0 %v1076, 102
  %v1135 = vpop.permute.xlu0 %1134
  %1136 = vrot.lane.b32.xlu0 %v1077, 102
  %v1137 = vpop.permute.xlu0 %1136
  %vm1138 = vcmask 834560
  %v1139 = vsel %vm1138, %v1099, %v1101
  %v1140 = vsel %vm1138, %v1101, %v1103
  %v1141 = vsel %vm1138, %v1103, %v1105
  %v1142 = vsel %vm1138, %v1105, %v1107
  %v1143 = vsel %vm1138, %v1109, %v1111
  %v1144 = vsel %vm1138, %v1111, %v1113
  %v1145 = vsel %vm1138, %v1113, %v1115
  %v1146 = vsel %vm1138, %v1115, %v1117
  %v1147 = vsel %vm1138, %v1119, %v1121
  %v1148 = vsel %vm1138, %v1121, %v1123
  %v1149 = vsel %vm1138, %v1123, %v1125
  %v1150 = vsel %vm1138, %v1125, %v1127
  %v1151 = vsel %vm1138, %v1129, %v1131
  %v1152 = vsel %vm1138, %v1131, %v1133
  %v1153 = vsel %vm1138, %v1133, %v1135
  %v1154 = vsel %vm1138, %v1135, %v1137
  %1171 = vst [vmem:[#allocation3 + $0x300] sm:$0xff] %v1139
  %1172 = vst [vmem:[#allocation3 + $0x308] sm:$0xff] %v1140
  %1173 = vst [vmem:[#allocation3 + $0x310] sm:$0xff] %v1141
  %1174 = vst [vmem:[#allocation3 + $0x318] sm:$0xff] %v1142
  %1175 = vst [vmem:[#allocation3 + $0x320] sm:$0xff] %v1143
  %1176 = vst [vmem:[#allocation3 + $0x328] sm:$0xff] %v1144
  %1177 = vst [vmem:[#allocation3 + $0x330] sm:$0xff] %v1145
  %1178 = vst [vmem:[#allocation3 + $0x338] sm:$0xff] %v1146
  %1179 = vst [vmem:[#allocation3 + $0x340] sm:$0xff] %v1147
  %1180 = vst [vmem:[#allocation3 + $0x348] sm:$0xff] %v1148
  %1181 = vst [vmem:[#allocation3 + $0x350] sm:$0xff] %v1149
  %1182 = vst [vmem:[#allocation3 + $0x358] sm:$0xff] %v1150
  %1183 = vst [vmem:[#allocation3 + $0x360] sm:$0xff] %v1151
  %1184 = vst [vmem:[#allocation3 + $0x368] sm:$0xff] %v1152
  %1185 = vst [vmem:[#allocation3 + $0x370] sm:$0xff] %v1153
  %1186 = vst [vmem:[#allocation3 + $0x378] sm:$0xff] %v1154
  %v1187 = vld [vmem:[#allocation2] sm:$0xff]
  %v1188 = vld [vmem:[#allocation2 + $0x8] sm:$0xff]
  %v1189 = vld [vmem:[#allocation2 + $0x10] sm:$0xff]
  %v1190 = vld [vmem:[#allocation2 + $0x18] sm:$0xff]
  %v1191 = vld [vmem:[#allocation2 + $0x20] sm:$0xff]
  %v1192 = vld [vmem:[#allocation2 + $0x28] sm:$0xff]
  %v1193 = vld [vmem:[#allocation2 + $0x30] sm:$0xff]
  %v1194 = vld [vmem:[#allocation2 + $0x38] sm:$0xff]
  %v1195 = vld [vmem:[#allocation2 + $0x40] sm:$0xff]
  %v1196 = vld [vmem:[#allocation2 + $0x48] sm:$0xff]
  %v1197 = vld [vmem:[#allocation2 + $0x50] sm:$0xff]
  %v1198 = vld [vmem:[#allocation2 + $0x58] sm:$0xff]
  %v1199 = vld [vmem:[#allocation2 + $0x60] sm:$0xff]
  %v1200 = vld [vmem:[#allocation2 + $0x68] sm:$0xff]
  %v1201 = vld [vmem:[#allocation2 + $0x70] sm:$0xff]
  %v1202 = vld [vmem:[#allocation2 + $0x78] sm:$0xff]
  %v1203 = vld [vmem:[#allocation2 + $0x80] sm:$0xff]
  %v1204 = vld [vmem:[#allocation2 + $0x88] sm:$0xff]
  %v1205 = vld [vmem:[#allocation2 + $0x90] sm:$0xff]
  %v1206 = vld [vmem:[#allocation2 + $0x98] sm:$0xff]
  %1227 = vrot.lane.b32.xlu0 %v1187, 101
  %v1228 = vpop.permute.xlu0 %1227
  %1229 = vrot.lane.b32.xlu0 %v1188, 101
  %v1230 = vpop.permute.xlu0 %1229
  %1231 = vrot.lane.b32.xlu0 %v1189, 101
  %v1232 = vpop.permute.xlu0 %1231
  %1233 = vrot.lane.b32.xlu0 %v1190, 101
  %v1234 = vpop.permute.xlu0 %1233
  %1235 = vrot.lane.b32.xlu0 %v1191, 101
  %v1236 = vpop.permute.xlu0 %1235
  %1237 = vrot.lane.b32.xlu0 %v1192, 101
  %v1238 = vpop.permute.xlu0 %1237
  %1239 = vrot.lane.b32.xlu0 %v1193, 101
  %v1240 = vpop.permute.xlu0 %1239
  %1241 = vrot.lane.b32.xlu0 %v1194, 101
  %v1242 = vpop.permute.xlu0 %1241
  %1243 = vrot.lane.b32.xlu0 %v1195, 101
  %v1244 = vpop.permute.xlu0 %1243
  %1245 = vrot.lane.b32.xlu0 %v1196, 101
  %v1246 = vpop.permute.xlu0 %1245
  %1247 = vrot.lane.b32.xlu0 %v1197, 101
  %v1248 = vpop.permute.xlu0 %1247
  %1249 = vrot.lane.b32.xlu0 %v1198, 101
  %v1250 = vpop.permute.xlu0 %1249
  %1251 = vrot.lane.b32.xlu0 %v1199, 101
  %v1252 = vpop.permute.xlu0 %1251
  %1253 = vrot.lane.b32.xlu0 %v1200, 101
  %v1254 = vpop.permute.xlu0 %1253
  %1255 = vrot.lane.b32.xlu0 %v1201, 101
  %v1256 = vpop.permute.xlu0 %1255
  %1257 = vrot.lane.b32.xlu0 %v1202, 101
  %v1258 = vpop.permute.xlu0 %1257
  %1259 = vrot.lane.b32.xlu0 %v1203, 101
  %v1260 = vpop.permute.xlu0 %1259
  %1261 = vrot.lane.b32.xlu0 %v1204, 101
  %v1262 = vpop.permute.xlu0 %1261
  %1263 = vrot.lane.b32.xlu0 %v1205, 101
  %v1264 = vpop.permute.xlu0 %1263
  %1265 = vrot.lane.b32.xlu0 %v1206, 101
  %v1266 = vpop.permute.xlu0 %1265
  %vm1267 = vcmask 826368
  %v1268 = vsel %vm1267, %v1228, %v1230
  %v1269 = vsel %vm1267, %v1230, %v1232
  %v1270 = vsel %vm1267, %v1232, %v1234
  %v1271 = vsel %vm1267, %v1234, %v1236
  %v1272 = vsel %vm1267, %v1238, %v1240
  %v1273 = vsel %vm1267, %v1240, %v1242
  %v1274 = vsel %vm1267, %v1242, %v1244
  %v1275 = vsel %vm1267, %v1244, %v1246
  %v1276 = vsel %vm1267, %v1248, %v1250
  %v1277 = vsel %vm1267, %v1250, %v1252
  %v1278 = vsel %vm1267, %v1252, %v1254
  %v1279 = vsel %vm1267, %v1254, %v1256
  %v1280 = vsel %vm1267, %v1258, %v1260
  %v1281 = vsel %vm1267, %v1260, %v1262
  %v1282 = vsel %vm1267, %v1262, %v1264
  %v1283 = vsel %vm1267, %v1264, %v1266
  %1300 = vst [vmem:[#allocation3 + $0x380] sm:$0xff] %v1268
  %1301 = vst [vmem:[#allocation3 + $0x388] sm:$0xff] %v1269
  %1302 = vst [vmem:[#allocation3 + $0x390] sm:$0xff] %v1270
  %1303 = vst [vmem:[#allocation3 + $0x398] sm:$0xff] %v1271
  %1304 = vst [vmem:[#allocation3 + $0x3a0] sm:$0xff] %v1272
  %1305 = vst [vmem:[#allocation3 + $0x3a8] sm:$0xff] %v1273
  %1306 = vst [vmem:[#allocation3 + $0x3b0] sm:$0xff] %v1274
  %1307 = vst [vmem:[#allocation3 + $0x3b8] sm:$0xff] %v1275
  %1308 = vst [vmem:[#allocation3 + $0x3c0] sm:$0xff] %v1276
  %1309 = vst [vmem:[#allocation3 + $0x3c8] sm:$0xff] %v1277
  %1310 = vst [vmem:[#allocation3 + $0x3d0] sm:$0xff] %v1278
  %1311 = vst [vmem:[#allocation3 + $0x3d8] sm:$0xff] %v1279
  %1312 = vst [vmem:[#allocation3 + $0x3e0] sm:$0xff] %v1280
  %1313 = vst [vmem:[#allocation3 + $0x3e8] sm:$0xff] %v1281
  %1314 = vst [vmem:[#allocation3 + $0x3f0] sm:$0xff] %v1282
  %1315 = vst [vmem:[#allocation3 + $0x3f8] sm:$0xff] %v1283
  %v1316 = vld [vmem:[#allocation2] sm:$0xff]
  %v1317 = vld [vmem:[#allocation2 + $0x8] sm:$0xff]
  %v1318 = vld [vmem:[#allocation2 + $0x10] sm:$0xff]
  %v1319 = vld [vmem:[#allocation2 + $0x18] sm:$0xff]
  %v1320 = vld [vmem:[#allocation2 + $0x20] sm:$0xff]
  %v1321 = vld [vmem:[#allocation2 + $0x28] sm:$0xff]
  %v1322 = vld [vmem:[#allocation2 + $0x30] sm:$0xff]
  %v1323 = vld [vmem:[#allocation2 + $0x38] sm:$0xff]
  %v1324 = vld [vmem:[#allocation2 + $0x40] sm:$0xff]
  %v1325 = vld [vmem:[#allocation2 + $0x48] sm:$0xff]
  %v1326 = vld [vmem:[#allocation2 + $0x50] sm:$0xff]
  %v1327 = vld [vmem:[#allocation2 + $0x58] sm:$0xff]
  %v1328 = vld [vmem:[#allocation2 + $0x60] sm:$0xff]
  %v1329 = vld [vmem:[#allocation2 + $0x68] sm:$0xff]
  %v1330 = vld [vmem:[#allocation2 + $0x70] sm:$0xff]
  %v1331 = vld [vmem:[#allocation2 + $0x78] sm:$0xff]
  %v1332 = vld [vmem:[#allocation2 + $0x80] sm:$0xff]
  %v1333 = vld [vmem:[#allocation2 + $0x88] sm:$0xff]
  %v1334 = vld [vmem:[#allocation2 + $0x90] sm:$0xff]
  %v1335 = vld [vmem:[#allocation2 + $0x98] sm:$0xff]
  %1356 = vrot.lane.b32.xlu0 %v1316, 100
  %v1357 = vpop.permute.xlu0 %1356
  %1358 = vrot.lane.b32.xlu0 %v1317, 100
  %v1359 = vpop.permute.xlu0 %1358
  %1360 = vrot.lane.b32.xlu0 %v1318, 100
  %v1361 = vpop.permute.xlu0 %1360
  %1362 = vrot.lane.b32.xlu0 %v1319, 100
  %v1363 = vpop.permute.xlu0 %1362
  %1364 = vrot.lane.b32.xlu0 %v1320, 100
  %v1365 = vpop.permute.xlu0 %1364
  %1366 = vrot.lane.b32.xlu0 %v1321, 100
  %v1367 = vpop.permute.xlu0 %1366
  %1368 = vrot.lane.b32.xlu0 %v1322, 100
  %v1369 = vpop.permute.xlu0 %1368
  %1370 = vrot.lane.b32.xlu0 %v1323, 100
  %v1371 = vpop.permute.xlu0 %1370
  %1372 = vrot.lane.b32.xlu0 %v1324, 100
  %v1373 = vpop.permute.xlu0 %1372
  %1374 = vrot.lane.b32.xlu0 %v1325, 100
  %v1375 = vpop.permute.xlu0 %1374
  %1376 = vrot.lane.b32.xlu0 %v1326, 100
  %v1377 = vpop.permute.xlu0 %1376
  %1378 = vrot.lane.b32.xlu0 %v1327, 100
  %v1379 = vpop.permute.xlu0 %1378
  %1380 = vrot.lane.b32.xlu0 %v1328, 100
  %v1381 = vpop.permute.xlu0 %1380
  %1382 = vrot.lane.b32.xlu0 %v1329, 100
  %v1383 = vpop.permute.xlu0 %1382
  %1384 = vrot.lane.b32.xlu0 %v1330, 100
  %v1385 = vpop.permute.xlu0 %1384
  %1386 = vrot.lane.b32.xlu0 %v1331, 100
  %v1387 = vpop.permute.xlu0 %1386
  %1388 = vrot.lane.b32.xlu0 %v1332, 100
  %v1389 = vpop.permute.xlu0 %1388
  %1390 = vrot.lane.b32.xlu0 %v1333, 100
  %v1391 = vpop.permute.xlu0 %1390
  %1392 = vrot.lane.b32.xlu0 %v1334, 100
  %v1393 = vpop.permute.xlu0 %1392
  %1394 = vrot.lane.b32.xlu0 %v1335, 100
  %v1395 = vpop.permute.xlu0 %1394
  %vm1396 = vcmask 818176
  %v1397 = vsel %vm1396, %v1357, %v1359
  %v1398 = vsel %vm1396, %v1359, %v1361
  %v1399 = vsel %vm1396, %v1361, %v1363
  %v1400 = vsel %vm1396, %v1363, %v1365
  %v1401 = vsel %vm1396, %v1367, %v1369
  %v1402 = vsel %vm1396, %v1369, %v1371
  %v1403 = vsel %vm1396, %v1371, %v1373
  %v1404 = vsel %vm1396, %v1373, %v1375
  %v1405 = vsel %vm1396, %v1377, %v1379
  %v1406 = vsel %vm1396, %v1379, %v1381
  %v1407 = vsel %vm1396, %v1381, %v1383
  %v1408 = vsel %vm1396, %v1383, %v1385
  %v1409 = vsel %vm1396, %v1387, %v1389
  %v1410 = vsel %vm1396, %v1389, %v1391
  %v1411 = vsel %vm1396, %v1391, %v1393
  %v1412 = vsel %vm1396, %v1393, %v1395
  %1429 = vst [vmem:[#allocation3 + $0x400] sm:$0xff] %v1397
  %1430 = vst [vmem:[#allocation3 + $0x408] sm:$0xff] %v1398
  %1431 = vst [vmem:[#allocation3 + $0x410] sm:$0xff] %v1399
  %1432 = vst [vmem:[#allocation3 + $0x418] sm:$0xff] %v1400
  %1433 = vst [vmem:[#allocation3 + $0x420] sm:$0xff] %v1401
  %1434 = vst [vmem:[#allocation3 + $0x428] sm:$0xff] %v1402
  %1435 = vst [vmem:[#allocation3 + $0x430] sm:$0xff] %v1403
  %1436 = vst [vmem:[#allocation3 + $0x438] sm:$0xff] %v1404
  %1437 = vst [vmem:[#allocation3 + $0x440] sm:$0xff] %v1405
  %1438 = vst [vmem:[#allocation3 + $0x448] sm:$0xff] %v1406
  %1439 = vst [vmem:[#allocation3 + $0x450] sm:$0xff] %v1407
  %1440 = vst [vmem:[#allocation3 + $0x458] sm:$0xff] %v1408
  %1441 = vst [vmem:[#allocation3 + $0x460] sm:$0xff] %v1409
  %1442 = vst [vmem:[#allocation3 + $0x468] sm:$0xff] %v1410
  %1443 = vst [vmem:[#allocation3 + $0x470] sm:$0xff] %v1411
  %1444 = vst [vmem:[#allocation3 + $0x478] sm:$0xff] %v1412
  %v1445 = vld [vmem:[%s2] sm:$0x3f]
  %v1446 = vld [vmem:[#allocation3] sm:$0xff]
  %v1447 = vld [vmem:[#allocation3 + $0x8] sm:$0xff]
  %v1448 = vld [vmem:[#allocation3 + $0x10] sm:$0xff]
  %v1449 = vld [vmem:[#allocation3 + $0x18] sm:$0xff]
  %v1450 = vld [vmem:[#allocation3 + $0x20] sm:$0xff]
  %v1451 = vld [vmem:[#allocation3 + $0x28] sm:$0xff]
  %v1452 = vld [vmem:[#allocation3 + $0x30] sm:$0xff]
  %v1453 = vld [vmem:[#allocation3 + $0x38] sm:$0xff]
  %v1454 = vld [vmem:[#allocation3 + $0x40] sm:$0xff]
  %v1455 = vld [vmem:[#allocation3 + $0x48] sm:$0xff]
  %v1456 = vld [vmem:[#allocation3 + $0x50] sm:$0xff]
  %v1457 = vld [vmem:[#allocation3 + $0x58] sm:$0xff]
  %v1458 = vld [vmem:[#allocation3 + $0x60] sm:$0xff]
  %v1459 = vld [vmem:[#allocation3 + $0x68] sm:$0xff]
  %v1460 = vld [vmem:[#allocation3 + $0x70] sm:$0xff]
  %v1461 = vld [vmem:[#allocation3 + $0x78] sm:$0xff]
  %v1462 = vld [vmem:[#allocation3 + $0x80] sm:$0xff]
  %v1463 = vld [vmem:[#allocation3 + $0x88] sm:$0xff]
  %v1464 = vld [vmem:[#allocation3 + $0x90] sm:$0xff]
  %v1465 = vld [vmem:[#allocation3 + $0x98] sm:$0xff]
  %v1466 = vld [vmem:[#allocation3 + $0xa0] sm:$0xff]
  %v1467 = vld [vmem:[#allocation3 + $0xa8] sm:$0xff]
  %v1468 = vld [vmem:[#allocation3 + $0xb0] sm:$0xff]
  %v1469 = vld [vmem:[#allocation3 + $0xb8] sm:$0xff]
  %v1470 = vld [vmem:[#allocation3 + $0xc0] sm:$0xff]
  %v1471 = vld [vmem:[#allocation3 + $0xc8] sm:$0xff]
  %v1472 = vld [vmem:[#allocation3 + $0xd0] sm:$0xff]
  %v1473 = vld [vmem:[#allocation3 + $0xd8] sm:$0xff]
  %v1474 = vld [vmem:[#allocation3 + $0xe0] sm:$0xff]
  %v1475 = vld [vmem:[#allocation3 + $0xe8] sm:$0xff]
  %v1476 = vld [vmem:[#allocation3 + $0xf0] sm:$0xff]
  %v1477 = vld [vmem:[#allocation3 + $0xf8] sm:$0xff]
  %v1478 = vld [vmem:[#allocation3 + $0x100] sm:$0xff]
  %v1479 = vld [vmem:[#allocation3 + $0x108] sm:$0xff]
  %v1480 = vld [vmem:[#allocation3 + $0x110] sm:$0xff]
  %v1481 = vld [vmem:[#allocation3 + $0x118] sm:$0xff]
  %v1482 = vld [vmem:[#allocation3 + $0x120] sm:$0xff]
  %v1483 = vld [vmem:[#allocation3 + $0x128] sm:$0xff]
  %v1484 = vld [vmem:[#allocation3 + $0x130] sm:$0xff]
  %v1485 = vld [vmem:[#allocation3 + $0x138] sm:$0xff]
  %v1486 = vld [vmem:[#allocation3 + $0x140] sm:$0xff]
  %v1487 = vld [vmem:[#allocation3 + $0x148] sm:$0xff]
  %v1488 = vld [vmem:[#allocation3 + $0x150] sm:$0xff]
  %v1489 = vld [vmem:[#allocation3 + $0x158] sm:$0xff]
  %v1490 = vld [vmem:[#allocation3 + $0x160] sm:$0xff]
  %v1491 = vld [vmem:[#allocation3 + $0x168] sm:$0xff]
  %v1492 = vld [vmem:[#allocation3 + $0x170] sm:$0xff]
  %v1493 = vld [vmem:[#allocation3 + $0x178] sm:$0xff]
  %v1494 = vld [vmem:[#allocation3 + $0x180] sm:$0xff]
  %v1495 = vld [vmem:[#allocation3 + $0x188] sm:$0xff]
  %v1496 = vld [vmem:[#allocation3 + $0x190] sm:$0xff]
  %v1497 = vld [vmem:[#allocation3 + $0x198] sm:$0xff]
  %v1498 = vld [vmem:[#allocation3 + $0x1a0] sm:$0xff]
  %v1499 = vld [vmem:[#allocation3 + $0x1a8] sm:$0xff]
  %v1500 = vld [vmem:[#allocation3 + $0x1b0] sm:$0xff]
  %v1501 = vld [vmem:[#allocation3 + $0x1b8] sm:$0xff]
  %v1502 = vld [vmem:[#allocation3 + $0x1c0] sm:$0xff]
  %v1503 = vld [vmem:[#allocation3 + $0x1c8] sm:$0xff]
  %v1504 = vld [vmem:[#allocation3 + $0x1d0] sm:$0xff]
  %v1505 = vld [vmem:[#allocation3 + $0x1d8] sm:$0xff]
  %v1506 = vld [vmem:[#allocation3 + $0x1e0] sm:$0xff]
  %v1507 = vld [vmem:[#allocation3 + $0x1e8] sm:$0xff]
  %v1508 = vld [vmem:[#allocation3 + $0x1f0] sm:$0xff]
  %v1509 = vld [vmem:[#allocation3 + $0x1f8] sm:$0xff]
  %v1510 = vld [vmem:[#allocation3 + $0x200] sm:$0xff]
  %v1511 = vld [vmem:[#allocation3 + $0x208] sm:$0xff]
  %v1512 = vld [vmem:[#allocation3 + $0x210] sm:$0xff]
  %v1513 = vld [vmem:[#allocation3 + $0x218] sm:$0xff]
  %v1514 = vld [vmem:[#allocation3 + $0x220] sm:$0xff]
  %v1515 = vld [vmem:[#allocation3 + $0x228] sm:$0xff]
  %v1516 = vld [vmem:[#allocation3 + $0x230] sm:$0xff]
  %v1517 = vld [vmem:[#allocation3 + $0x238] sm:$0xff]
  %v1518 = vld [vmem:[#allocation3 + $0x240] sm:$0xff]
  %v1519 = vld [vmem:[#allocation3 + $0x248] sm:$0xff]
  %v1520 = vld [vmem:[#allocation3 + $0x250] sm:$0xff]
  %v1521 = vld [vmem:[#allocation3 + $0x258] sm:$0xff]
  %v1522 = vld [vmem:[#allocation3 + $0x260] sm:$0xff]
  %v1523 = vld [vmem:[#allocation3 + $0x268] sm:$0xff]
  %v1524 = vld [vmem:[#allocation3 + $0x270] sm:$0xff]
  %v1525 = vld [vmem:[#allocation3 + $0x278] sm:$0xff]
  %v1526 = vld [vmem:[#allocation3 + $0x280] sm:$0xff]
  %v1527 = vld [vmem:[#allocation3 + $0x288] sm:$0xff]
  %v1528 = vld [vmem:[#allocation3 + $0x290] sm:$0xff]
  %v1529 = vld [vmem:[#allocation3 + $0x298] sm:$0xff]
  %v1530 = vld [vmem:[#allocation3 + $0x2a0] sm:$0xff]
  %v1531 = vld [vmem:[#allocation3 + $0x2a8] sm:$0xff]
  %v1532 = vld [vmem:[#allocation3 + $0x2b0] sm:$0xff]
  %v1533 = vld [vmem:[#allocation3 + $0x2b8] sm:$0xff]
  %v1534 = vld [vmem:[#allocation3 + $0x2c0] sm:$0xff]
  %v1535 = vld [vmem:[#allocation3 + $0x2c8] sm:$0xff]
  %v1536 = vld [vmem:[#allocation3 + $0x2d0] sm:$0xff]
  %v1537 = vld [vmem:[#allocation3 + $0x2d8] sm:$0xff]
  %v1538 = vld [vmem:[#allocation3 + $0x2e0] sm:$0xff]
  %v1539 = vld [vmem:[#allocation3 + $0x2e8] sm:$0xff]
  %v1540 = vld [vmem:[#allocation3 + $0x2f0] sm:$0xff]
  %v1541 = vld [vmem:[#allocation3 + $0x2f8] sm:$0xff]
  %v1542 = vld [vmem:[#allocation3 + $0x300] sm:$0xff]
  %v1543 = vld [vmem:[#allocation3 + $0x308] sm:$0xff]
  %v1544 = vld [vmem:[#allocation3 + $0x310] sm:$0xff]
  %v1545 = vld [vmem:[#allocation3 + $0x318] sm:$0xff]
  %v1546 = vld [vmem:[#allocation3 + $0x320] sm:$0xff]
  %v1547 = vld [vmem:[#allocation3 + $0x328] sm:$0xff]
  %v1548 = vld [vmem:[#allocation3 + $0x330] sm:$0xff]
  %v1549 = vld [vmem:[#allocation3 + $0x338] sm:$0xff]
  %v1550 = vld [vmem:[#allocation3 + $0x340] sm:$0xff]
  %v1551 = vld [vmem:[#allocation3 + $0x348] sm:$0xff]
  %v1552 = vld [vmem:[#allocation3 + $0x350] sm:$0xff]
  %v1553 = vld [vmem:[#allocation3 + $0x358] sm:$0xff]
  %v1554 = vld [vmem:[#allocation3 + $0x360] sm:$0xff]
  %v1555 = vld [vmem:[#allocation3 + $0x368] sm:$0xff]
  %v1556 = vld [vmem:[#allocation3 + $0x370] sm:$0xff]
  %v1557 = vld [vmem:[#allocation3 + $0x378] sm:$0xff]
  %v1558 = vld [vmem:[#allocation3 + $0x380] sm:$0xff]
  %v1559 = vld [vmem:[#allocation3 + $0x388] sm:$0xff]
  %v1560 = vld [vmem:[#allocation3 + $0x390] sm:$0xff]
  %v1561 = vld [vmem:[#allocation3 + $0x398] sm:$0xff]
  %v1562 = vld [vmem:[#allocation3 + $0x3a0] sm:$0xff]
  %v1563 = vld [vmem:[#allocation3 + $0x3a8] sm:$0xff]
  %v1564 = vld [vmem:[#allocation3 + $0x3b0] sm:$0xff]
  %v1565 = vld [vmem:[#allocation3 + $0x3b8] sm:$0xff]
  %v1566 = vld [vmem:[#allocation3 + $0x3c0] sm:$0xff]
  %v1567 = vld [vmem:[#allocation3 + $0x3c8] sm:$0xff]
  %v1568 = vld [vmem:[#allocation3 + $0x3d0] sm:$0xff]
  %v1569 = vld [vmem:[#allocation3 + $0x3d8] sm:$0xff]
  %v1570 = vld [vmem:[#allocation3 + $0x3e0] sm:$0xff]
  %v1571 = vld [vmem:[#allocation3 + $0x3e8] sm:$0xff]
  %v1572 = vld [vmem:[#allocation3 + $0x3f0] sm:$0xff]
  %v1573 = vld [vmem:[#allocation3 + $0x3f8] sm:$0xff]
  %v1574 = vld [vmem:[#allocation3 + $0x400] sm:$0xff]
  %v1575 = vld [vmem:[#allocation3 + $0x408] sm:$0xff]
  %v1576 = vld [vmem:[#allocation3 + $0x410] sm:$0xff]
  %v1577 = vld [vmem:[#allocation3 + $0x418] sm:$0xff]
  %v1578 = vld [vmem:[#allocation3 + $0x420] sm:$0xff]
  %v1579 = vld [vmem:[#allocation3 + $0x428] sm:$0xff]
  %v1580 = vld [vmem:[#allocation3 + $0x430] sm:$0xff]
  %v1581 = vld [vmem:[#allocation3 + $0x438] sm:$0xff]
  %v1582 = vld [vmem:[#allocation3 + $0x440] sm:$0xff]
  %v1583 = vld [vmem:[#allocation3 + $0x448] sm:$0xff]
  %v1584 = vld [vmem:[#allocation3 + $0x450] sm:$0xff]
  %v1585 = vld [vmem:[#allocation3 + $0x458] sm:$0xff]
  %v1586 = vld [vmem:[#allocation3 + $0x460] sm:$0xff]
  %v1587 = vld [vmem:[#allocation3 + $0x468] sm:$0xff]
  %v1588 = vld [vmem:[#allocation3 + $0x470] sm:$0xff]
  %v1589 = vld [vmem:[#allocation3 + $0x478] sm:$0xff]
  %v1590 = vld [vmem:[%s3] sm:$0x3]
  %1592 = vset.pattern.permute.xlu0 0
  %1593 = vperm.xlu0 %1592, %v1590
  %v1594 = vpop.permute.xlu0 %1593
  %v1597 = vcombine.high %v1445, %v1445
  %v1599 = vunpack.c.l.s4 1983009808
  %v1600 = vunpack.c.0.s8 %v1599
  %v1601 = vlaneseq
  %v1602 = vshrl.u32 %v1601, 7
  %v1603 = vsub.s32 %v1600, %v1602
  %v1604 = vrot.slane %v1445, %v1603
  %v1606 = vunpack.c.l.s4 1983009808
  %v1607 = vunpack.c.0.s8 %v1606
  %v1608 = vlaneseq
  %v1609 = vshrl.u32 %v1608, 7
  %v1610 = vsub.s32 %v1607, %v1609
  %v1611 = vrot.slane %v1597, %v1610
  %v1612 = vcombine.high %v1604, %v1604
  %vm1615 = vcmask 261120
  %v1616 = vsel %vm1615, %v1611, 0
  %1618 = vmatprep.subr.mxu0 %v1447
  %1619 = vmatpush1.msra.mxu0 %v1446
  %1620 = vmatprep.subr.mxu0 %v1451
  %1621 = vmatpush1.msra.mxu0 %v1450
  %1622 = vmatprep.subr.mxu0 %v1455
  %1623 = vmatpush1.msra.mxu0 %v1454
  %1624 = vmatprep.subr.mxu0 %v1459
  %1625 = vmatpush1.msra.mxu0 %v1458
  %1626 = vmatprep.subr.mxu0 %v1463
  %1627 = vmatpush1.msra.mxu0 %v1462
  %1628 = vmatprep.subr.mxu0 %v1467
  %1629 = vmatpush1.msra.mxu0 %v1466
  %1630 = vmatprep.subr.mxu0 %v1471
  %1631 = vmatpush1.msra.mxu0 %v1470
  %1632 = vmatprep.subr.mxu0 %v1475
  %1633 = vmatpush1.msra.mxu0 %v1474
  %1634 = vmatprep.subr.mxu0 %v1479
  %1635 = vmatpush1.msra.mxu0 %v1478
  %1636 = vmatprep.subr.mxu0 %v1483
  %1637 = vmatpush1.msra.mxu0 %v1482
  %1638 = vmatprep.subr.mxu0 %v1487
  %1639 = vmatpush1.msra.mxu0 %v1486
  %1640 = vmatprep.subr.mxu0 %v1491
  %1641 = vmatpush1.msra.mxu0 %v1490
  %1642 = vmatprep.subr.mxu0 %v1495
  %1643 = vmatpush1.msra.mxu0 %v1494
  %1644 = vmatprep.subr.mxu0 %v1499
  %1645 = vmatpush1.msra.mxu0 %v1498
  %1646 = vmatprep.subr.mxu0 %v1503
  %1647 = vmatpush1.msra.mxu0 %v1502
  %1648 = vmatprep.subr.mxu0 %v1507
  %1649 = vmatpush1.msra.mxu0 %v1506
  %1650 = vmatprep.subr.mxu0 %v1511
  %1651 = vmatpush1.msra.mxu0 %v1510
  %1652 = vmatprep.subr.mxu0 %v1515
  %1653 = vmatpush1.msra.mxu0 %v1514
  %1654 = vmatprep.subr.mxu0 %v1519
  %1655 = vmatpush1.msra.mxu0 %v1518
  %1656 = vmatprep.subr.mxu0 %v1523
  %1657 = vmatpush1.msra.mxu0 %v1522
  %1658 = vmatprep.subr.mxu0 %v1527
  %1659 = vmatpush1.msra.mxu0 %v1526
  %1660 = vmatprep.subr.mxu0 %v1531
  %1661 = vmatpush1.msra.mxu0 %v1530
  %1662 = vmatprep.subr.mxu0 %v1535
  %1663 = vmatpush1.msra.mxu0 %v1534
  %1664 = vmatprep.subr.mxu0 %v1539
  %1665 = vmatpush1.msra.mxu0 %v1538
  %1666 = vmatprep.subr.mxu0 %v1543
  %1667 = vmatpush1.msra.mxu0 %v1542
  %1668 = vmatprep.subr.mxu0 %v1547
  %1669 = vmatpush1.msra.mxu0 %v1546
  %1670 = vmatprep.subr.mxu0 %v1551
  %1671 = vmatpush1.msra.mxu0 %v1550
  %1672 = vmatprep.subr.mxu0 %v1555
  %1673 = vmatpush1.msra.mxu0 %v1554
  %1674 = vmatprep.subr.mxu0 %v1559
  %1675 = vmatpush1.msra.mxu0 %v1558
  %1676 = vmatprep.subr.mxu0 %v1563
  %1677 = vmatpush1.msra.mxu0 %v1562
  %1678 = vmatprep.subr.mxu0 %v1567
  %1679 = vmatpush1.msra.mxu0 %v1566
  %1680 = vmatprep.subr.mxu0 %v1571
  %1681 = vmatpush1.msra.mxu0 %v1570
  %1682 = vmatprep.mubr.f32.mxu0 %v1612
  %1683 = vmatmul.mubr.f32.gmra.mrb[0].mxu0 %v1604
  %v1684 = vpop.f32.mrb[0].mxu0
  %v1685 = vadd.f32 %v1594, %v1684
  %v1686 = vpop.f32.mrb[0].mxu0
  %v1687 = vadd.f32 %v1594, %v1686
  %1688 = vdwg.mxu0
  %1689 = vmatprep.subr.mxu0 %v1575
  %1690 = vmatpush1.msra.mxu0 %v1574
  %1691 = vmatprep.subr.mxu0 %v1579
  %1692 = vmatpush1.msra.mxu0 %v1578
  %1693 = vmatprep.subr.mxu0 %v1583
  %1694 = vmatpush1.msra.mxu0 %v1582
  %1695 = vmatprep.subr.mxu0 %v1587
  %1696 = vmatpush1.msra.mxu0 %v1586
  %1697 = vmatprep.subr.mxu0 0.0
  %1698 = vmatpush1.msra.mxu0 0.0
  %1699 = vmatprep.subr.mxu0 0.0
  %1700 = vmatpush1.msra.mxu0 0.0
  %1701 = vmatprep.subr.mxu0 0.0
  %1702 = vmatpush1.msra.mxu0 0.0
  %1703 = vmatprep.subr.mxu0 0.0
  %1704 = vmatpush1.msra.mxu0 0.0
  %1705 = vmatprep.subr.mxu0 0.0
  %1706 = vmatpush1.msra.mxu0 0.0
  %1707 = vmatprep.subr.mxu0 0.0
  %1708 = vmatpush1.msra.mxu0 0.0
  %1709 = vmatprep.subr.mxu0 0.0
  %1710 = vmatpush1.msra.mxu0 0.0
  %1711 = vmatprep.subr.mxu0 0.0
  %1712 = vmatpush1.msra.mxu0 0.0
  %1713 = vmatprep.subr.mxu0 0.0
  %1714 = vmatpush1.msra.mxu0 0.0
  %1715 = vmatprep.subr.mxu0 0.0
  %1716 = vmatpush1.msra.mxu0 0.0
  %1717 = vmatprep.subr.mxu0 0.0
  %1718 = vmatpush1.msra.mxu0 0.0
  %1719 = vmatprep.subr.mxu0 0.0
  %1720 = vmatpush1.msra.mxu0 0.0
  %1721 = vmatprep.subr.mxu0 0.0
  %1722 = vmatpush1.msra.mxu0 0.0
  %1723 = vmatprep.subr.mxu0 0.0
  %1724 = vmatpush1.msra.mxu0 0.0
  %1725 = vmatprep.subr.mxu0 0.0
  %1726 = vmatpush1.msra.mxu0 0.0
  %1727 = vmatprep.subr.mxu0 0.0
  %1728 = vmatpush1.msra.mxu0 0.0
  %1729 = vmatprep.subr.mxu0 0.0
  %1730 = vmatpush1.msra.mxu0 0.0
  %1731 = vmatprep.subr.mxu0 0.0
  %1732 = vmatpush1.msra.mxu0 0.0
  %1733 = vmatprep.subr.mxu0 0.0
  %1734 = vmatpush1.msra.mxu0 0.0
  %1735 = vmatprep.subr.mxu0 0.0
  %1736 = vmatpush1.msra.mxu0 0.0
  %1737 = vmatprep.subr.mxu0 0.0
  %1738 = vmatpush1.msra.mxu0 0.0
  %1739 = vmatprep.subr.mxu0 0.0
  %1740 = vmatpush1.msra.mxu0 0.0
  %1741 = vmatprep.subr.mxu0 0.0
  %1742 = vmatpush1.msra.mxu0 0.0
  %1743 = vmatprep.subr.mxu0 0.0
  %1744 = vmatpush1.msra.mxu0 0.0
  %1745 = vmatprep.subr.mxu0 0.0
  %1746 = vmatpush1.msra.mxu0 0.0
  %1747 = vmatprep.subr.mxu0 0.0
  %1748 = vmatpush1.msra.mxu0 0.0
  %1749 = vmatprep.subr.mxu0 0.0
  %1750 = vmatpush1.msra.mxu0 0.0
  %1751 = vmatprep.subr.mxu0 0.0
  %1752 = vmatpush1.msra.mxu0 0.0
  %1753 = vmatprep.mubr.f32.mxu0 0.0
  %1754 = vmatmul.mubr.f32.gmra.mrb[0].mxu0 %v1616
  %v1755 = vpop.f32.mrb[0].mxu0
  %v1756 = vadd.f32 %v1685, %v1755
  %v1757 = vpop.f32.mrb[0].mxu0
  %v1758 = vadd.f32 %v1687, %v1757
  %1759 = vdwg.mxu0
  %1760 = vmatprep.subr.mxu0 %v1449
  %1761 = vmatpush1.msra.mxu0 %v1448
  %1762 = vmatprep.subr.mxu0 %v1453
  %1763 = vmatpush1.msra.mxu0 %v1452
  %1764 = vmatprep.subr.mxu0 %v1457
  %1765 = vmatpush1.msra.mxu0 %v1456
  %1766 = vmatprep.subr.mxu0 %v1461
  %1767 = vmatpush1.msra.mxu0 %v1460
  %1768 = vmatprep.subr.mxu0 %v1465
  %1769 = vmatpush1.msra.mxu0 %v1464
  %1770 = vmatprep.subr.mxu0 %v1469
  %1771 = vmatpush1.msra.mxu0 %v1468
  %1772 = vmatprep.subr.mxu0 %v1473
  %1773 = vmatpush1.msra.mxu0 %v1472
  %1774 = vmatprep.subr.mxu0 %v1477
  %1775 = vmatpush1.msra.mxu0 %v1476
  %1776 = vmatprep.subr.mxu0 %v1481
  %1777 = vmatpush1.msra.mxu0 %v1480
  %1778 = vmatprep.subr.mxu0 %v1485
  %1779 = vmatpush1.msra.mxu0 %v1484
  %1780 = vmatprep.subr.mxu0 %v1489
  %1781 = vmatpush1.msra.mxu0 %v1488
  %1782 = vmatprep.subr.mxu0 %v1493
  %1783 = vmatpush1.msra.mxu0 %v1492
  %1784 = vmatprep.subr.mxu0 %v1497
  %1785 = vmatpush1.msra.mxu0 %v1496
  %1786 = vmatprep.subr.mxu0 %v1501
  %1787 = vmatpush1.msra.mxu0 %v1500
  %1788 = vmatprep.subr.mxu0 %v1505
  %1789 = vmatpush1.msra.mxu0 %v1504
  %1790 = vmatprep.subr.mxu0 %v1509
  %1791 = vmatpush1.msra.mxu0 %v1508
  %1792 = vmatprep.subr.mxu0 %v1513
  %1793 = vmatpush1.msra.mxu0 %v1512
  %1794 = vmatprep.subr.mxu0 %v1517
  %1795 = vmatpush1.msra.mxu0 %v1516
  %1796 = vmatprep.subr.mxu0 %v1521
  %1797 = vmatpush1.msra.mxu0 %v1520
  %1798 = vmatprep.subr.mxu0 %v1525
  %1799 = vmatpush1.msra.mxu0 %v1524
  %1800 = vmatprep.subr.mxu0 %v1529
  %1801 = vmatpush1.msra.mxu0 %v1528
  %1802 = vmatprep.subr.mxu0 %v1533
  %1803 = vmatpush1.msra.mxu0 %v1532
  %1804 = vmatprep.subr.mxu0 %v1537
  %1805 = vmatpush1.msra.mxu0 %v1536
  %1806 = vmatprep.subr.mxu0 %v1541
  %1807 = vmatpush1.msra.mxu0 %v1540
  %1808 = vmatprep.subr.mxu0 %v1545
  %1809 = vmatpush1.msra.mxu0 %v1544
  %1810 = vmatprep.subr.mxu0 %v1549
  %1811 = vmatpush1.msra.mxu0 %v1548
  %1812 = vmatprep.subr.mxu0 %v1553
  %1813 = vmatpush1.msra.mxu0 %v1552
  %1814 = vmatprep.subr.mxu0 %v1557
  %1815 = vmatpush1.msra.mxu0 %v1556
  %1816 = vmatprep.subr.mxu0 %v1561
  %1817 = vmatpush1.msra.mxu0 %v1560
  %1818 = vmatprep.subr.mxu0 %v1565
  %1819 = vmatpush1.msra.mxu0 %v1564
  %1820 = vmatprep.subr.mxu0 %v1569
  %1821 = vmatpush1.msra.mxu0 %v1568
  %1822 = vmatprep.subr.mxu0 %v1573
  %1823 = vmatpush1.msra.mxu0 %v1572
  %1824 = vmatprep.mubr.f32.mxu0 %v1612
  %1825 = vmatmul.mubr.f32.gmra.mrb[0].mxu0 %v1604
  %v1826 = vpop.f32.mrb[0].mxu0
  %v1827 = vadd.f32 %v1594, %v1826
  %v1828 = vpop.f32.mrb[0].mxu0
  %v1829 = vadd.f32 %v1594, %v1828
  %1830 = vdwg.mxu0
  %1831 = vmatprep.subr.mxu0 %v1577
  %1832 = vmatpush1.msra.mxu0 %v1576
  %1833 = vmatprep.subr.mxu0 %v1581
  %1834 = vmatpush1.msra.mxu0 %v1580
  %1835 = vmatprep.subr.mxu0 %v1585
  %1836 = vmatpush1.msra.mxu0 %v1584
  %1837 = vmatprep.subr.mxu0 %v1589
  %1838 = vmatpush1.msra.mxu0 %v1588
  %1839 = vmatprep.subr.mxu0 0.0
  %1840 = vmatpush1.msra.mxu0 0.0
  %1841 = vmatprep.subr.mxu0 0.0
  %1842 = vmatpush1.msra.mxu0 0.0
  %1843 = vmatprep.subr.mxu0 0.0
  %1844 = vmatpush1.msra.mxu0 0.0
  %1845 = vmatprep.subr.mxu0 0.0
  %1846 = vmatpush1.msra.mxu0 0.0
  %1847 = vmatprep.subr.mxu0 0.0
  %1848 = vmatpush1.msra.mxu0 0.0
  %1849 = vmatprep.subr.mxu0 0.0
  %1850 = vmatpush1.msra.mxu0 0.0
  %1851 = vmatprep.subr.mxu0 0.0
  %1852 = vmatpush1.msra.mxu0 0.0
  %1853 = vmatprep.subr.mxu0 0.0
  %1854 = vmatpush1.msra.mxu0 0.0
  %1855 = vmatprep.subr.mxu0 0.0
  %1856 = vmatpush1.msra.mxu0 0.0
  %1857 = vmatprep.subr.mxu0 0.0
  %1858 = vmatpush1.msra.mxu0 0.0
  %1859 = vmatprep.subr.mxu0 0.0
  %1860 = vmatpush1.msra.mxu0 0.0
  %1861 = vmatprep.subr.mxu0 0.0
  %1862 = vmatpush1.msra.mxu0 0.0
  %1863 = vmatprep.subr.mxu0 0.0
  %1864 = vmatpush1.msra.mxu0 0.0
  %1865 = vmatprep.subr.mxu0 0.0
  %1866 = vmatpush1.msra.mxu0 0.0
  %1867 = vmatprep.subr.mxu0 0.0
  %1868 = vmatpush1.msra.mxu0 0.0
  %1869 = vmatprep.subr.mxu0 0.0
  %1870 = vmatpush1.msra.mxu0 0.0
  %1871 = vmatprep.subr.mxu0 0.0
  %1872 = vmatpush1.msra.mxu0 0.0
  %1873 = vmatprep.subr.mxu0 0.0
  %1874 = vmatpush1.msra.mxu0 0.0
  %1875 = vmatprep.subr.mxu0 0.0
  %1876 = vmatpush1.msra.mxu0 0.0
  %1877 = vmatprep.subr.mxu0 0.0
  %1878 = vmatpush1.msra.mxu0 0.0
  %1879 = vmatprep.subr.mxu0 0.0
  %1880 = vmatpush1.msra.mxu0 0.0
  %1881 = vmatprep.subr.mxu0 0.0
  %1882 = vmatpush1.msra.mxu0 0.0
  %1883 = vmatprep.subr.mxu0 0.0
  %1884 = vmatpush1.msra.mxu0 0.0
  %1885 = vmatprep.subr.mxu0 0.0
  %1886 = vmatpush1.msra.mxu0 0.0
  %1887 = vmatprep.subr.mxu0 0.0
  %1888 = vmatpush1.msra.mxu0 0.0
  %1889 = vmatprep.subr.mxu0 0.0
  %1890 = vmatpush1.msra.mxu0 0.0
  %1891 = vmatprep.subr.mxu0 0.0
  %1892 = vmatpush1.msra.mxu0 0.0
  %1893 = vmatprep.subr.mxu0 0.0
  %1894 = vmatpush1.msra.mxu0 0.0
  %1895 = vmatprep.mubr.f32.mxu0 0.0
  %1896 = vmatmul.mubr.f32.gmra.mrb[0].mxu0 %v1616
  %v1897 = vpop.f32.mrb[0].mxu0
  %v1898 = vadd.f32 %v1827, %v1897
  %v1899 = vpop.f32.mrb[0].mxu0
  %v1900 = vadd.f32 %v1829, %v1899
  %1901 = vdwg.mxu0
  %v1906 = vcombine.low %v1756, %v1758
  %v1907 = vcombine.low %v1898, %v1900
  %v1909 = vunpack.c.l.s4 1983009808
  %v1910 = vunpack.c.0.s8 %v1909
  %v1911 = vlaneseq
  %v1912 = vshrl.u32 %v1911, 7
  %v1913 = vsub.s32 %v1910, %v1912
  %v1914 = vrot.slane %v1906, %v1913
  %v1916 = vunpack.c.l.s4 1983009808
  %v1917 = vunpack.c.0.s8 %v1916
  %v1918 = vlaneseq
  %v1919 = vshrl.u32 %v1918, 7
  %v1920 = vsub.s32 %v1917, %v1919
  %v1921 = vrot.slane %v1907, %v1920
  %v1922 = vcombine.low %v1914, %v1921
  %1924 = vst [vmem:[%s4] sm:$0xff] %v1922
  // Predicated region
  $region18: #{single_ended_ez_conv_forward.1} parent=0 // pred_check
    _
  $region19: #{single_ended_ez_conv_forward.1} parent=0 // pred_check_branch
    %1926 = sbr.rel (0) target = $region21
  $region20: #{single_ended_ez_conv_forward.1} parent=0 // pred_region
    _
  $region21: #{single_ended_ez_conv_forward.1} parent=0 // pred_fallthru
    _
  // Predicated region
  $region22: #{single_ended_ez_conv_forward.1} parent=0 // pred_check
    _
  $region23: #{single_ended_ez_conv_forward.1} parent=0 // pred_check_branch
    %1928 = sbr.rel (0) target = $region25
  $region24: #{single_ended_ez_conv_forward.1} parent=0 // pred_region
    _
  $region25: #{single_ended_ez_conv_forward.1} parent=0 // pred_fallthru
    _

</llo_original>
